<compile_context>
chip_gen: v5e
topology: v5e:2x2
jax: 0.10.0
libtpu: 0.0.40
codegen_flags: <defaults>
</compile_context>

<pallas_src>
import functools

import jax
import jax.numpy as jnp
from jax import lax
from jax.experimental import pallas as pl
from jax.experimental.pallas import tpu as pltpu


def _round_up(a: int, m: int) -> int:
    return -(-a // m) * m


def _vmem_capacity_bytes(default_bytes: int = 64 * 1024 * 1024) -> int:
    """Physical VMEM per core (v5e/v6e: 128 MiB, v7x: 64 MiB); conservative fallback."""
    try:
        info = pltpu.get_tpu_info()
        cap = getattr(info, "vmem_capacity_bytes", None)
        if cap:
            return int(cap)
    except Exception:
        pass
    return default_bytes


def _soft_triple_kernel(emb_ref, w_ref, lab_ref, cmask_ref, loss_ref, *,
                        n_center, c_pad, batch, tiles_per_core,
                        inv_gamma, logit_scale, margin_scale,
                        s_prescaled, unit_norm_embeddings):
    p = pl.program_id(0)          # partial-sum / TensorCore axis ("parallel")
    j = pl.program_id(1)          # batch-tile reduction axis ("arbitrary")
    K, Cp = n_center, c_pad
    TB = emb_ref.shape[0]

    @pl.when(j == 0)
    def _init():
        loss_ref[...] = jnp.zeros_like(loss_ref)

    emb = emb_ref[...]

    def slab(k):
        # (TB, E) x (E, Cp) MXU matmul; the weight slice is a static, 128-aligned
        # lane slice of the resident (E, K*Cp) block.
        s = jnp.dot(emb, w_ref[:, k * Cp:(k + 1) * Cp],
                    preferred_element_type=jnp.float32)
        # on the bf16 default path 1/gamma is already folded into the weights
        return s if s_prescaled else s * inv_gamma

    # Online softmax over the K centers, fused with the per-center matmuls so the
    # (TB, K*Cp) similarity intermediate is never materialized.
    if unit_norm_embeddings:
        # |s_k| <= 1/gamma when embeddings and centers are unit norm: constant
        # stabilizer, no running max / rescale.
        num = jnp.zeros((TB, Cp), jnp.float32)
        den = jnp.zeros((TB, Cp), jnp.float32)
        for k in range(K):
            s_k = slab(k)
            e_k = jnp.exp(s_k - inv_gamma)
            den = den + e_k
            num = num + e_k * s_k
    else:
        s0 = slab(0)
        m = s0
        den = jnp.ones((TB, Cp), jnp.float32)   # e_0 = exp(0) = 1
        num = s0
        for k in range(1, K):
            s_k = slab(k)
            m_new = jnp.maximum(m, s_k)
            alpha = jnp.exp(m - m_new)
            e_k = jnp.exp(s_k - m_new)
            den = den * alpha + e_k
            num = num * alpha + e_k * s_k
            m = m_new

    # hq = sum_k softmax(s)_k * s_k  (= h / gamma);  lmd * h = logit_scale * hq.
    hq = num * pl.reciprocal(den, approx=False)

    # ---- cross entropy with margin subtracted on the true class ----
    lab = lab_ref[...]                                            # (TB, 1) int32
    col = lax.broadcasted_iota(jnp.int32, (TB, Cp), 1)
    onehot = (col == lab).astype(jnp.float32)                     # reused twice
    # cmask: resident (1, Cp) additive row (0 for real classes, -1e30 for padded lanes)
    logits = logit_scale * hq - margin_scale * onehot + cmask_ref[...]
    lmax = jnp.max(logits, axis=1, keepdims=True)
    lse = jnp.log(jnp.sum(jnp.exp(logits - lmax), axis=1, keepdims=True)) + lmax
    true_logit = jnp.sum(logits * onehot, axis=1, keepdims=True)

    # mask batch-padding rows; accumulate the CE *sum* into this partial's resident
    # (1,1,1) output block.
    row = (p * tiles_per_core + j) * TB + lax.broadcasted_iota(jnp.int32, (TB, 1), 0)
    row_ok = (row < batch).astype(jnp.float32)
    loss_ref[...] += jnp.sum((lse - true_logit) * row_ok)


def soft_triple_loss(embeddings, labels, fc, *, n_class, n_center,
                     lmd=10.0, gamma=0.1, tau=0.2, margin=0.01,
                     tile_b=256, num_partials=2,
                     matmul_dtype=jnp.bfloat16,
                     unit_norm_embeddings=False):
    """Pallas implementation of SoftTripleLoss.forward.

    embeddings: (B, E) float32
    labels:     (B,)   int32, values in [0, n_class)
    fc:         (n_class * n_center, E) float32 (unnormalized centers)
    matmul_dtype: bf16 (default, fast MXU path) or f32 (bit-faithful verification path)
    unit_norm_embeddings: set True only if embeddings are L2-normalized upstream.
    """
    B, E = embeddings.shape
    C, K = int(n_class), int(n_center)
    assert float(gamma) > 0.0, "gamma must be positive (softmax over centers)"
    inv_gamma = 1.0 / float(gamma)
    use_bf16 = jnp.dtype(matmul_dtype) == jnp.dtype(jnp.bfloat16)

    # L2-normalize centers once (matches F.normalize, eps=1e-12); shared by the
    # similarity matmul and the wrapper-side regularizer.
    norm = jnp.sqrt(jnp.sum(fc * fc, axis=1, keepdims=True))
    w = fc / jnp.maximum(norm, 1e-12)                 # (C*K, E), row = class*K + center

    # lane-dense class padding; also make K*c_pad a multiple of 256 for the
    # 256-wide v6e/v7x MXU (no remainder N pass).
    c_pad = _round_up(C, 128)
    if (K * c_pad) % 256 != 0:
        c_pad = _round_up(C, 256)

    # center-major, class-padded weights: column k*c_pad + c holds center k of class c
    w_kce = jnp.transpose(w.reshape(C, K, E), (1, 0, 2))          # (K, C, E)
    w_kce = jnp.pad(w_kce, ((0, 0), (0, c_pad - C), (0, 0)))
    w_t = jnp.transpose(w_kce.reshape(K * c_pad, E), (1, 0))      # (E, K*c_pad)

    # Fold 1/gamma into the matmul weights on the default bf16 path (kills a VPU
    # multiply per element per center in the hottest loop).  On the f32 path keep the
    # operands identical to the reference so the result agrees to f32 ULPs.
    s_prescaled = bool(use_bf16)
    if s_prescaled:
        w_t = w_t * inv_gamma
    w_t = w_t.astype(matmul_dtype)

    emb_bytes = 2 if use_bf16 else 4
    w_bytes = 2 if use_bf16 else 4
    align = 16 if use_bf16 else 8

    # ---- batch tile sized against this generation's VMEM capacity ----
    vmem_cap = _vmem_capacity_bytes()

    def vmem_needed(tb_):
        return (2 * tb_ * E * emb_bytes            # double-buffered embedding tiles
                + 2 * E * K * c_pad * w_bytes      # resident weights (worst case 2 bufs)
                + 2 * tb_ * 128 * 4                # label tiles (lane padded)
                + 2 * 8 * c_pad * 4                # class-padding mask
                + 8 * tb_ * c_pad * 4              # f32 online-softmax / CE temporaries
                + (1 << 20))                       # slack

    tb = _round_up(max(align, min(int(tile_b), B)), align)
    target = int(vmem_cap * 0.75)
    while vmem_needed(tb) > target and tb > align:
        tb = max(align, _round_up(tb // 2, align))

    nb = -(-B // tb)
    n_par = max(1, min(int(num_partials), nb))     # 2 partials feed v7x's 2 TensorCores
    tiles_per_core = -(-nb // n_par)
    b_pad = n_par * tiles_per_core * tb

    emb_p = jnp.pad(embeddings.astype(jnp.float32),
                    ((0, b_pad - B), (0, 0))).astype(matmul_dtype)
    lab_p = jnp.pad(labels.astype(jnp.int32).reshape(B, 1), ((0, b_pad - B), (0, 0)))
    cmask = jnp.where(jnp.arange(c_pad) < C, 0.0, -1e30).astype(jnp.float32)
    cmask = cmask.reshape(1, c_pad)

    kernel = functools.partial(
        _soft_triple_kernel,
        n_center=K, c_pad=c_pad, batch=B, tiles_per_core=tiles_per_core,
        inv_gamma=inv_gamma,
        logit_scale=float(lmd) * float(gamma),
        margin_scale=float(lmd) * float(margin),
        s_prescaled=s_prescaled,
        unit_norm_embeddings=bool(unit_norm_embeddings))

    cost = pl.CostEstimate(
        flops=int(2 * b_pad * E * K * c_pad),
        transcendentals=int((2 * K + 1) * b_pad * c_pad),
        bytes_accessed=int(b_pad * E * emb_bytes + E * K * c_pad * w_bytes
                           + b_pad * 4 + c_pad * 4 + n_par * 4))

    vmem_limit = int(min(max(vmem_needed(tb) + (4 << 20), 32 << 20),
                         vmem_cap - (2 << 20)))

    def run(single_buffer_weights):
        tpc = tiles_per_core
        data_map = lambda p_, j_: (p_ * tpc + j_, 0)
        if single_buffer_weights:
            # constant index_map -> never refetched; Buffered(1) drops the useless
            # second buffer and halves the largest VMEM resident.
            w_spec = pl.BlockSpec((E, K * c_pad), lambda p_, j_: (0, 0),
                                  pipeline_mode=pl.Buffered(1))
            m_spec = pl.BlockSpec((1, c_pad), lambda p_, j_: (0, 0),
                                  pipeline_mode=pl.Buffered(1))
        else:
            w_spec = pl.BlockSpec((E, K * c_pad), lambda p_, j_: (0, 0))
            m_spec = pl.BlockSpec((1, c_pad), lambda p_, j_: (0, 0))
        call = pl.pallas_call(
            kernel,
            out_shape=jax.ShapeDtypeStruct((n_par, 1, 1), jnp.float32),
            grid_spec=pltpu.PrefetchScalarGridSpec(
                num_scalar_prefetch=0,
                grid=(n_par, tiles_per_core),
                in_specs=[
                    pl.BlockSpec((tb, E), data_map),     # embedding tile
                    w_spec,                              # resident weights
                    pl.BlockSpec((tb, 1), data_map),     # label tile (thin int32)
                    m_spec,                              # class-padding mask row
                ],
                out_specs=pl.BlockSpec((1, 1, 1), lambda p_, j_: (p_, 0, 0)),
            ),
            compiler_params=pltpu.CompilerParams(
                dimension_semantics=("parallel", "arbitrary"),
                vmem_limit_bytes=vmem_limit),
            cost_estimate=cost,
        )
        return call(emb_p, w_t, lab_p, cmask)

    try:
        partials = run(True)
    except Exception:
        # pipeline_mode=pl.Buffered(1) not supported by this jax build on the
        # pallas_call path; fall back to default double-buffered weight block.
        partials = run(False)

    loss_cls = jnp.sum(partials) * (1.0 / B)

    # intra-class center-diversity regularizer: O(C*K^2*E), done once in plain XLA
    if tau > 0.0 and K > 1:
        wc = w.reshape(C, K, E)
        gram = jnp.einsum('cke,cje->ckj', wc, wc)
        sub = 1.0 - gram
        sub = jnp.where(sub <= 0.0, 1e-10, sub)
        triu = jnp.triu(jnp.ones((K, K), jnp.float32), k=1)[None]
        reg = jnp.sum(jnp.sqrt(2.0 * sub) * triu) / (C * K * (K - 1.0))
        return loss_cls + tau * reg
    return loss_cls


def _reference(embeddings, labels, fc, *, n_class, n_center,
               lmd=10.0, gamma=0.1, tau=0.2, margin=0.01):
    """Pure-JAX reference mirroring the PyTorch module (for verification)."""
    B = embeddings.shape[0]
    C, K = n_class, n_center
    norm = jnp.sqrt(jnp.sum(fc * fc, axis=1, keepdims=True))
    w = fc / jnp.maximum(norm, 1e-12)
    x = (embeddings @ w.T).reshape(B, C, K)
    prob = jax.nn.softmax((1.0 / gamma) * x, axis=2)
    h = jnp.sum(prob * x, axis=2)
    margin_m = margin * jax.nn.one_hot(labels, C, dtype=jnp.float32)
    logits = lmd * (h - margin_m)
    logp = jax.nn.log_softmax(logits, axis=1)
    loss_cls = -jnp.mean(jnp.take_along_axis(logp, labels[:, None], axis=1))
    wc = w.reshape(C, K, -1)
    gram = jnp.einsum('cke,cje->ckj', wc, wc)
    sub = 1.0 - gram
    sub = jnp.where(sub <= 0.0, 1e-10, sub)
    triu = jnp.triu(jnp.ones((K, K)), k=1)[None]
    reg = jnp.sum(jnp.sqrt(2.0 * sub) * triu) / (C * K * (K - 1.0))
    return loss_cls + tau * reg


if __name__ == "__main__":
    # small, module-consistent shapes
    B, E, C, K = 64, 32, 8, 3

    key = jax.random.PRNGKey(0)
    k_fc, k_emb, k_lab = jax.random.split(key, 3)

    # deterministic kaiming_uniform_-style init for fc (fan_in = E, gain = sqrt(2))
    bound = (6.0 / E) ** 0.5
    fc = jax.random.uniform(k_fc, (C * K, E), jnp.float32, minval=-bound, maxval=bound)

    embeddings = jax.random.normal(k_emb, (B, E), jnp.float32)
    labels = jax.random.randint(k_lab, (B,), 0, C, dtype=jnp.int32)

    ref = _reference(embeddings, labels, fc, n_class=C, n_center=K)

    # f32 verification path (matmul operands identical to the reference):
    # tile_b=8, num_partials=2 -> grid (2, 4), exercising both the parallel-partial
    # axis and the pl.when-accumulated batch reduction.
    loss_f32 = soft_triple_loss(embeddings, labels, fc, n_class=C, n_center=K,
                                tile_b=8, num_partials=2, matmul_dtype=jnp.float32)
    loss_f32 = jax.block_until_ready(loss_f32)
    assert jnp.allclose(loss_f32, ref, rtol=1e-4, atol=1e-4), (loss_f32, ref)

    # default fast path: bf16 MXU operands with 1/gamma folded into the weights
    # (loose tolerance: bf16 operand rounding only; all softmax/CE math stays f32).
    loss_bf16 = soft_triple_loss(embeddings, labels, fc, n_class=C, n_center=K,
                                 tile_b=16, num_partials=2)
    loss_bf16 = jax.block_until_ready(loss_bf16)
    assert jnp.allclose(loss_bf16, ref, rtol=5e-2, atol=8e-2), (loss_bf16, ref)

    print("KERNEL_OK")
</pallas_src>

<mosaic_0001>
module attributes {stable_mosaic.version = 11 : i64} {
  func.func @_soft_triple_kernel(%arg0: i32, %arg1: i32, %arg2: memref<8x32xf32, #tpu.memory_space<vmem>>, %arg3: memref<32x768xf32, #tpu.memory_space<vmem>>, %arg4: memref<8x1xi32, #tpu.memory_space<vmem>>, %arg5: memref<1x256xf32, #tpu.memory_space<vmem>>, %arg6: memref<1x1x1xf32, #tpu.memory_space<vmem>>) attributes {dimension_semantics = [#tpu.dimension_semantics<parallel>, #tpu.dimension_semantics<arbitrary>], iteration_bounds = array<i64: 2, 4>, scalar_prefetch = 0 : i64, scratch_operands = 0 : i64, tpu.core_type = #tpu.core_type<tc>, window_params = [{transform_indices = @transform_0, window_bounds = array<i64: 8, 32>}, {pipeline_mode = #tpu.pipeline_mode<synchronous>, transform_indices = @transform_1, window_bounds = array<i64: 32, 768>}, {transform_indices = @transform_2, window_bounds = array<i64: 8, 1>}, {pipeline_mode = #tpu.pipeline_mode<synchronous>, transform_indices = @transform_3, window_bounds = array<i64: 1, 256>}, {transform_indices = @transform_4, window_bounds = array<i64: 1, 1, 1>}]} {
    %c0_i32 = arith.constant 0 : i32
    %0 = arith.cmpi eq, %arg1, %c0_i32 : i32
    %1 = arith.extui %0 : i1 to i32
    %c0_i32_0 = arith.constant 0 : i32
    %2 = arith.cmpi ne, %1, %c0_i32_0 : i32
    scf.if %2 {
      %cst_28 = arith.constant 0.000000e+00 : f32
      %85 = vector.broadcast %cst_28 : f32 to vector<1x1x1xf32>
      %c0_29 = arith.constant 0 : index
      %c0_30 = arith.constant 0 : index
      %c0_31 = arith.constant 0 : index
      %86 = vector.load %arg6[%c0_29, %c0_30, %c0_31] : memref<1x1x1xf32, #tpu.memory_space<vmem>>, vector<1x1x1xf32>
      tpu.vector_store %arg6[%c0_29, %c0_30, %c0_31], %85 {strides = array<i32>} : memref<1x1x1xf32, #tpu.memory_space<vmem>>, vector<1x1x1xf32>,
    } else {
    }
    %c0 = arith.constant 0 : index
    %c0_1 = arith.constant 0 : index
    %3 = vector.load %arg2[%c0, %c0_1] : memref<8x32xf32, #tpu.memory_space<vmem>>, vector<8x32xf32>
    %c0_2 = arith.constant 0 : index
    %c0_3 = arith.constant 0 : index
    %4 = vector.load %arg3[%c0_2, %c0_3] : memref<32x768xf32, #tpu.memory_space<vmem>>, vector<32x256xf32>
    %cst = arith.constant dense<0.000000e+00> : vector<8x256xf32>
    %5 = tpu.matmul %3, %4, %cst {dimension_numbers = #tpu.dot_dimension_numbers<[1], [0], [0], [1], [0, 0, 1, 1], [], []>} : vector<8x32xf32>, vector<32x256xf32>, vector<8x256xf32> -> vector<8x256xf32>
    %cst_4 = arith.constant 1.000000e+01 : f32
    %6 = vector.broadcast %cst_4 : f32 to vector<8x256xf32>
    %7 = arith.mulf %5, %6 : vector<8x256xf32>
    %cst_5 = arith.constant 1.000000e+00 : f32
    %8 = vector.broadcast %cst_5 : f32 to vector<8x256xf32>
    %c0_6 = arith.constant 0 : index
    %c256 = arith.constant 256 : index
    %9 = vector.load %arg3[%c0_6, %c256] : memref<32x768xf32, #tpu.memory_space<vmem>>, vector<32x256xf32>
    %cst_7 = arith.constant dense<0.000000e+00> : vector<8x256xf32>
    %10 = tpu.matmul %3, %9, %cst_7 {dimension_numbers = #tpu.dot_dimension_numbers<[1], [0], [0], [1], [0, 0, 1, 1], [], []>} : vector<8x32xf32>, vector<32x256xf32>, vector<8x256xf32> -> vector<8x256xf32>
    %cst_8 = arith.constant 1.000000e+01 : f32
    %11 = vector.broadcast %cst_8 : f32 to vector<8x256xf32>
    %12 = arith.mulf %10, %11 : vector<8x256xf32>
    %13 = arith.maximumf %7, %12 : vector<8x256xf32>
    %14 = arith.subf %7, %13 : vector<8x256xf32>
    %15 = math.exp %14 : vector<8x256xf32>
    %16 = arith.subf %12, %13 : vector<8x256xf32>
    %17 = math.exp %16 : vector<8x256xf32>
    %18 = arith.mulf %8, %15 : vector<8x256xf32>
    %19 = arith.addf %18, %17 : vector<8x256xf32>
    %20 = arith.mulf %7, %15 : vector<8x256xf32>
    %21 = arith.mulf %17, %12 : vector<8x256xf32>
    %22 = arith.addf %20, %21 : vector<8x256xf32>
    %c0_9 = arith.constant 0 : index
    %c512 = arith.constant 512 : index
    %23 = vector.load %arg3[%c0_9, %c512] : memref<32x768xf32, #tpu.memory_space<vmem>>, vector<32x256xf32>
    %cst_10 = arith.constant dense<0.000000e+00> : vector<8x256xf32>
    %24 = tpu.matmul %3, %23, %cst_10 {dimension_numbers = #tpu.dot_dimension_numbers<[1], [0], [0], [1], [0, 0, 1, 1], [], []>} : vector<8x32xf32>, vector<32x256xf32>, vector<8x256xf32> -> vector<8x256xf32>
    %cst_11 = arith.constant 1.000000e+01 : f32
    %25 = vector.broadcast %cst_11 : f32 to vector<8x256xf32>
    %26 = arith.mulf %24, %25 : vector<8x256xf32>
    %27 = arith.maximumf %13, %26 : vector<8x256xf32>
    %28 = arith.subf %13, %27 : vector<8x256xf32>
    %29 = math.exp %28 : vector<8x256xf32>
    %30 = arith.subf %26, %27 : vector<8x256xf32>
    %31 = math.exp %30 : vector<8x256xf32>
    %32 = arith.mulf %19, %29 : vector<8x256xf32>
    %33 = arith.addf %32, %31 : vector<8x256xf32>
    %34 = arith.mulf %22, %29 : vector<8x256xf32>
    %35 = arith.mulf %31, %26 : vector<8x256xf32>
    %36 = arith.addf %34, %35 : vector<8x256xf32>
    %37 = tpu.reciprocal %33 : vector<8x256xf32> -> vector<8x256xf32>
    %38 = arith.mulf %36, %37 : vector<8x256xf32>
    %c0_12 = arith.constant 0 : index
    %c0_13 = arith.constant 0 : index
    %39 = vector.load %arg4[%c0_12, %c0_13] : memref<8x1xi32, #tpu.memory_space<vmem>>, vector<8x1xi32>
    %40 = tpu.iota {dimensions = array<i32: 1>} : vector<8x256xi32>
    %41 = vector.broadcast %39 : vector<8x1xi32> to vector<8x256xi32>
    %42 = arith.cmpi eq, %40, %41 : vector<8x256xi32>
    %43 = arith.extui %42 : vector<8x256xi1> to vector<8x256xi32>
    %44 = arith.sitofp %43 : vector<8x256xi32> to vector<8x256xf32>
    %cst_14 = arith.constant 1.000000e+00 : f32
    %45 = vector.broadcast %cst_14 : f32 to vector<8x256xf32>
    %46 = arith.mulf %45, %38 : vector<8x256xf32>
    %cst_15 = arith.constant 1.000000e-01 : f32
    %47 = vector.broadcast %cst_15 : f32 to vector<8x256xf32>
    %48 = arith.mulf %47, %44 : vector<8x256xf32>
    %49 = arith.subf %46, %48 : vector<8x256xf32>
    %c0_16 = arith.constant 0 : index
    %c0_17 = arith.constant 0 : index
    %50 = vector.load %arg5[%c0_16, %c0_17] : memref<1x256xf32, #tpu.memory_space<vmem>>, vector<1x256xf32>
    %51 = vector.broadcast %50 : vector<1x256xf32> to vector<8x256xf32>
    %52 = arith.addf %49, %51 : vector<8x256xf32>
    %cst_18 = arith.constant dense<0xFF800000> : vector<8xf32>
    %53 = vector.multi_reduction <maximumf>, %52, %cst_18 [1] : vector<8x256xf32> to vector<8xf32>
    %54 = vector.shape_cast %53 : vector<8xf32> to vector<8x1xf32>
    %55 = vector.broadcast %54 : vector<8x1xf32> to vector<8x256xf32>
    %56 = arith.subf %52, %55 : vector<8x256xf32>
    %57 = math.exp %56 : vector<8x256xf32>
    %cst_19 = arith.constant dense<0.000000e+00> : vector<8xf32>
    %58 = vector.multi_reduction <add>, %57, %cst_19 [1] : vector<8x256xf32> to vector<8xf32>
    %59 = vector.shape_cast %58 : vector<8xf32> to vector<8x1xf32>
    %60 = math.log %59 : vector<8x1xf32>
    %61 = arith.addf %60, %54 : vector<8x1xf32>
    %62 = arith.mulf %52, %44 : vector<8x256xf32>
    %cst_20 = arith.constant dense<0.000000e+00> : vector<8xf32>
    %63 = vector.multi_reduction <add>, %62, %cst_20 [1] : vector<8x256xf32> to vector<8xf32>
    %64 = vector.shape_cast %63 : vector<8xf32> to vector<8x1xf32>
    %c4_i32 = arith.constant 4 : i32
    %65 = arith.muli %arg0, %c4_i32 : i32
    %66 = arith.addi %65, %arg1 : i32
    %c8_i32 = arith.constant 8 : i32
    %67 = arith.muli %66, %c8_i32 : i32
    %68 = tpu.iota {dimensions = array<i32: 0>} : vector<8x1xi32>
    %69 = vector.broadcast %67 : i32 to vector<8x1xi32>
    %70 = arith.addi %69, %68 : vector<8x1xi32>
    %c64_i32 = arith.constant 64 : i32
    %71 = vector.broadcast %c64_i32 : i32 to vector<8x1xi32>
    %72 = arith.cmpi slt, %70, %71 : vector<8x1xi32>
    %73 = arith.extui %72 : vector<8x1xi1> to vector<8x1xi32>
    %74 = arith.sitofp %73 : vector<8x1xi32> to vector<8x1xf32>
    %c0_21 = arith.constant 0 : index
    %c0_22 = arith.constant 0 : index
    %c0_23 = arith.constant 0 : index
    %75 = vector.load %arg6[%c0_21, %c0_22, %c0_23] : memref<1x1x1xf32, #tpu.memory_space<vmem>>, vector<1x1x1xf32>
    %76 = arith.subf %61, %64 : vector<8x1xf32>
    %77 = arith.mulf %76, %74 : vector<8x1xf32>
    %78 = vector.shape_cast %77 : vector<8x1xf32> to vector<1x8x1xf32>
    %cst_24 = arith.constant dense<0.000000e+00> : vector<1xf32>
    %79 = vector.multi_reduction <add>, %78, %cst_24 [1, 2] : vector<1x8x1xf32> to vector<1xf32>
    %80 = vector.shape_cast %79 : vector<1xf32> to vector<1x1x1xf32>
    %81 = vector.extract %80[0, 0, 0] : f32 from vector<1x1x1xf32>
    %82 = vector.broadcast %81 : f32 to vector<1x1x1xf32>
    %83 = arith.addf %75, %82 : vector<1x1x1xf32>
    %c0_25 = arith.constant 0 : index
    %c0_26 = arith.constant 0 : index
    %c0_27 = arith.constant 0 : index
    %84 = vector.load %arg6[%c0_25, %c0_26, %c0_27] : memref<1x1x1xf32, #tpu.memory_space<vmem>>, vector<1x1x1xf32>
    tpu.vector_store %arg6[%c0_25, %c0_26, %c0_27], %83 {strides = array<i32>} : memref<1x1x1xf32, #tpu.memory_space<vmem>>, vector<1x1x1xf32>,
    return
  }
  func.func @transform_0(%arg0: i32, %arg1: i32) -> (i32, i32) {
    %c4_i32 = arith.constant 4 : i32
    %0 = arith.muli %arg0, %c4_i32 : i32
    %1 = arith.addi %0, %arg1 : i32
    %c0_i32 = arith.constant 0 : i32
    %c0_i32_0 = arith.constant 0 : i32
    return %1, %c0_i32 : i32, i32
  }
  func.func @transform_1(%arg0: i32, %arg1: i32) -> (i32, i32) {
    %c0_i32 = arith.constant 0 : i32
    %c0_i32_0 = arith.constant 0 : i32
    %c0_i32_1 = arith.constant 0 : i32
    return %c0_i32, %c0_i32_0 : i32, i32
  }
  func.func @transform_2(%arg0: i32, %arg1: i32) -> (i32, i32) {
    %c4_i32 = arith.constant 4 : i32
    %0 = arith.muli %arg0, %c4_i32 : i32
    %1 = arith.addi %0, %arg1 : i32
    %c0_i32 = arith.constant 0 : i32
    %c0_i32_0 = arith.constant 0 : i32
    return %1, %c0_i32 : i32, i32
  }
  func.func @transform_3(%arg0: i32, %arg1: i32) -> (i32, i32) {
    %c0_i32 = arith.constant 0 : i32
    %c0_i32_0 = arith.constant 0 : i32
    %c0_i32_1 = arith.constant 0 : i32
    return %c0_i32, %c0_i32_0 : i32, i32
  }
  func.func @transform_4(%arg0: i32, %arg1: i32) -> (i32, i32, i32) {
    %c0_i32 = arith.constant 0 : i32
    %c0_i32_0 = arith.constant 0 : i32
    %c0_i32_1 = arith.constant 0 : i32
    return %arg0, %c0_i32, %c0_i32_0 : i32, i32, i32
  }
}

module attributes {stable_mosaic.version = 11 : i64} {
  func.func @_soft_triple_kernel(%arg0: i32, %arg1: i32, %arg2: memref<8x32xf32, #tpu.memory_space<vmem>>, %arg3: memref<32x768xf32, #tpu.memory_space<vmem>>, %arg4: memref<8x1xi32, #tpu.memory_space<vmem>>, %arg5: memref<1x256xf32, #tpu.memory_space<vmem>>, %arg6: memref<1x1x1xf32, #tpu.memory_space<vmem>>) attributes {dimension_semantics = [#tpu.dimension_semantics<parallel>, #tpu.dimension_semantics<arbitrary>], iteration_bounds = array<i64: 2, 4>, scalar_prefetch = 0 : i64, scratch_operands = 0 : i64, tpu.core_type = #tpu.core_type<tc>, window_params = [{transform_indices = @transform_0, window_bounds = array<i64: 8, 32>}, {pipeline_mode = #tpu.pipeline_mode<synchronous>, transform_indices = @transform_1, window_bounds = array<i64: 32, 768>}, {transform_indices = @transform_2, window_bounds = array<i64: 8, 1>}, {pipeline_mode = #tpu.pipeline_mode<synchronous>, transform_indices = @transform_3, window_bounds = array<i64: 1, 256>}, {transform_indices = @transform_4, window_bounds = array<i64: 1, 1, 1>}]} {
    %c0_i32 = arith.constant 0 : i32
    %0 = arith.cmpi eq, %arg1, %c0_i32 : i32
    %1 = arith.extui %0 : i1 to i32
    %c0_i32_0 = arith.constant 0 : i32
    %2 = arith.cmpi ne, %1, %c0_i32_0 : i32
    scf.if %2 {
      %cst_28 = arith.constant 0.000000e+00 : f32
      %85 = vector.broadcast %cst_28 : f32 to vector<1x1x1xf32>
      %c0_29 = arith.constant 0 : index
      %c0_30 = arith.constant 0 : index
      %c0_31 = arith.constant 0 : index
      %86 = vector.load %arg6[%c0_29, %c0_30, %c0_31] : memref<1x1x1xf32, #tpu.memory_space<vmem>>, vector<1x1x1xf32>
      tpu.vector_store %arg6[%c0_29, %c0_30, %c0_31], %85 {strides = array<i32>} : memref<1x1x1xf32, #tpu.memory_space<vmem>>, vector<1x1x1xf32>,
    } else {
    }
    %c0 = arith.constant 0 : index
    %c0_1 = arith.constant 0 : index
    %3 = vector.load %arg2[%c0, %c0_1] : memref<8x32xf32, #tpu.memory_space<vmem>>, vector<8x32xf32>
    %c0_2 = arith.constant 0 : index
    %c0_3 = arith.constant 0 : index
    %4 = vector.load %arg3[%c0_2, %c0_3] : memref<32x768xf32, #tpu.memory_space<vmem>>, vector<32x256xf32>
    %cst = arith.constant dense<0.000000e+00> : vector<8x256xf32>
    %5 = tpu.matmul %3, %4, %cst {dimension_numbers = #tpu.dot_dimension_numbers<[1], [0], [0], [1], [0, 0, 1, 1], [], []>} : vector<8x32xf32>, vector<32x256xf32>, vector<8x256xf32> -> vector<8x256xf32>
    %cst_4 = arith.constant 1.000000e+01 : f32
    %6 = vector.broadcast %cst_4 : f32 to vector<8x256xf32>
    %7 = arith.mulf %5, %6 : vector<8x256xf32>
    %cst_5 = arith.constant 1.000000e+00 : f32
    %8 = vector.broadcast %cst_5 : f32 to vector<8x256xf32>
    %c0_6 = arith.constant 0 : index
    %c256 = arith.constant 256 : index
    %9 = vector.load %arg3[%c0_6, %c256] : memref<32x768xf32, #tpu.memory_space<vmem>>, vector<32x256xf32>
    %cst_7 = arith.constant dense<0.000000e+00> : vector<8x256xf32>
    %10 = tpu.matmul %3, %9, %cst_7 {dimension_numbers = #tpu.dot_dimension_numbers<[1], [0], [0], [1], [0, 0, 1, 1], [], []>} : vector<8x32xf32>, vector<32x256xf32>, vector<8x256xf32> -> vector<8x256xf32>
    %cst_8 = arith.constant 1.000000e+01 : f32
    %11 = vector.broadcast %cst_8 : f32 to vector<8x256xf32>
    %12 = arith.mulf %10, %11 : vector<8x256xf32>
    %13 = arith.maximumf %7, %12 : vector<8x256xf32>
    %14 = arith.subf %7, %13 : vector<8x256xf32>
    %15 = math.exp %14 : vector<8x256xf32>
    %16 = arith.subf %12, %13 : vector<8x256xf32>
    %17 = math.exp %16 : vector<8x256xf32>
    %18 = arith.mulf %8, %15 : vector<8x256xf32>
    %19 = arith.addf %18, %17 : vector<8x256xf32>
    %20 = arith.mulf %7, %15 : vector<8x256xf32>
    %21 = arith.mulf %17, %12 : vector<8x256xf32>
    %22 = arith.addf %20, %21 : vector<8x256xf32>
    %c0_9 = arith.constant 0 : index
    %c512 = arith.constant 512 : index
    %23 = vector.load %arg3[%c0_9, %c512] : memref<32x768xf32, #tpu.memory_space<vmem>>, vector<32x256xf32>
    %cst_10 = arith.constant dense<0.000000e+00> : vector<8x256xf32>
    %24 = tpu.matmul %3, %23, %cst_10 {dimension_numbers = #tpu.dot_dimension_numbers<[1], [0], [0], [1], [0, 0, 1, 1], [], []>} : vector<8x32xf32>, vector<32x256xf32>, vector<8x256xf32> -> vector<8x256xf32>
    %cst_11 = arith.constant 1.000000e+01 : f32
    %25 = vector.broadcast %cst_11 : f32 to vector<8x256xf32>
    %26 = arith.mulf %24, %25 : vector<8x256xf32>
    %27 = arith.maximumf %13, %26 : vector<8x256xf32>
    %28 = arith.subf %13, %27 : vector<8x256xf32>
    %29 = math.exp %28 : vector<8x256xf32>
    %30 = arith.subf %26, %27 : vector<8x256xf32>
    %31 = math.exp %30 : vector<8x256xf32>
    %32 = arith.mulf %19, %29 : vector<8x256xf32>
    %33 = arith.addf %32, %31 : vector<8x256xf32>
    %34 = arith.mulf %22, %29 : vector<8x256xf32>
    %35 = arith.mulf %31, %26 : vector<8x256xf32>
    %36 = arith.addf %34, %35 : vector<8x256xf32>
    %37 = tpu.reciprocal %33 : vector<8x256xf32> -> vector<8x256xf32>
    %38 = arith.mulf %36, %37 : vector<8x256xf32>
    %c0_12 = arith.constant 0 : index
    %c0_13 = arith.constant 0 : index
    %39 = vector.load %arg4[%c0_12, %c0_13] : memref<8x1xi32, #tpu.memory_space<vmem>>, vector<8x1xi32>
    %40 = tpu.iota {dimensions = array<i32: 1>} : vector<8x256xi32>
    %41 = vector.broadcast %39 : vector<8x1xi32> to vector<8x256xi32>
    %42 = arith.cmpi eq, %40, %41 : vector<8x256xi32>
    %43 = arith.extui %42 : vector<8x256xi1> to vector<8x256xi32>
    %44 = arith.sitofp %43 : vector<8x256xi32> to vector<8x256xf32>
    %cst_14 = arith.constant 1.000000e+00 : f32
    %45 = vector.broadcast %cst_14 : f32 to vector<8x256xf32>
    %46 = arith.mulf %45, %38 : vector<8x256xf32>
    %cst_15 = arith.constant 1.000000e-01 : f32
    %47 = vector.broadcast %cst_15 : f32 to vector<8x256xf32>
    %48 = arith.mulf %47, %44 : vector<8x256xf32>
    %49 = arith.subf %46, %48 : vector<8x256xf32>
    %c0_16 = arith.constant 0 : index
    %c0_17 = arith.constant 0 : index
    %50 = vector.load %arg5[%c0_16, %c0_17] : memref<1x256xf32, #tpu.memory_space<vmem>>, vector<1x256xf32>
    %51 = vector.broadcast %50 : vector<1x256xf32> to vector<8x256xf32>
    %52 = arith.addf %49, %51 : vector<8x256xf32>
    %cst_18 = arith.constant dense<0xFF800000> : vector<8xf32>
    %53 = vector.multi_reduction <maximumf>, %52, %cst_18 [1] : vector<8x256xf32> to vector<8xf32>
    %54 = vector.shape_cast %53 : vector<8xf32> to vector<8x1xf32>
    %55 = vector.broadcast %54 : vector<8x1xf32> to vector<8x256xf32>
    %56 = arith.subf %52, %55 : vector<8x256xf32>
    %57 = math.exp %56 : vector<8x256xf32>
    %cst_19 = arith.constant dense<0.000000e+00> : vector<8xf32>
    %58 = vector.multi_reduction <add>, %57, %cst_19 [1] : vector<8x256xf32> to vector<8xf32>
    %59 = vector.shape_cast %58 : vector<8xf32> to vector<8x1xf32>
    %60 = math.log %59 : vector<8x1xf32>
    %61 = arith.addf %60, %54 : vector<8x1xf32>
    %62 = arith.mulf %52, %44 : vector<8x256xf32>
    %cst_20 = arith.constant dense<0.000000e+00> : vector<8xf32>
    %63 = vector.multi_reduction <add>, %62, %cst_20 [1] : vector<8x256xf32> to vector<8xf32>
    %64 = vector.shape_cast %63 : vector<8xf32> to vector<8x1xf32>
    %c4_i32 = arith.constant 4 : i32
    %65 = arith.muli %arg0, %c4_i32 : i32
    %66 = arith.addi %65, %arg1 : i32
    %c8_i32 = arith.constant 8 : i32
    %67 = arith.muli %66, %c8_i32 : i32
    %68 = tpu.iota {dimensions = array<i32: 0>} : vector<8x1xi32>
    %69 = vector.broadcast %67 : i32 to vector<8x1xi32>
    %70 = arith.addi %69, %68 : vector<8x1xi32>
    %c64_i32 = arith.constant 64 : i32
    %71 = vector.broadcast %c64_i32 : i32 to vector<8x1xi32>
    %72 = arith.cmpi slt, %70, %71 : vector<8x1xi32>
    %73 = arith.extui %72 : vector<8x1xi1> to vector<8x1xi32>
    %74 = arith.sitofp %73 : vector<8x1xi32> to vector<8x1xf32>
    %c0_21 = arith.constant 0 : index
    %c0_22 = arith.constant 0 : index
    %c0_23 = arith.constant 0 : index
    %75 = vector.load %arg6[%c0_21, %c0_22, %c0_23] : memref<1x1x1xf32, #tpu.memory_space<vmem>>, vector<1x1x1xf32>
    %76 = arith.subf %61, %64 : vector<8x1xf32>
    %77 = arith.mulf %76, %74 : vector<8x1xf32>
    %78 = vector.shape_cast %77 : vector<8x1xf32> to vector<1x8x1xf32>
    %cst_24 = arith.constant dense<0.000000e+00> : vector<1xf32>
    %79 = vector.multi_reduction <add>, %78, %cst_24 [1, 2] : vector<1x8x1xf32> to vector<1xf32>
    %80 = vector.shape_cast %79 : vector<1xf32> to vector<1x1x1xf32>
    %81 = vector.extract %80[0, 0, 0] : f32 from vector<1x1x1xf32>
    %82 = vector.broadcast %81 : f32 to vector<1x1x1xf32>
    %83 = arith.addf %75, %82 : vector<1x1x1xf32>
    %c0_25 = arith.constant 0 : index
    %c0_26 = arith.constant 0 : index
    %c0_27 = arith.constant 0 : index
    %84 = vector.load %arg6[%c0_25, %c0_26, %c0_27] : memref<1x1x1xf32, #tpu.memory_space<vmem>>, vector<1x1x1xf32>
    tpu.vector_store %arg6[%c0_25, %c0_26, %c0_27], %83 {strides = array<i32>} : memref<1x1x1xf32, #tpu.memory_space<vmem>>, vector<1x1x1xf32>,
    return
  }
  func.func @transform_0(%arg0: i32, %arg1: i32) -> (i32, i32) {
    %c4_i32 = arith.constant 4 : i32
    %0 = arith.muli %arg0, %c4_i32 : i32
    %1 = arith.addi %0, %arg1 : i32
    %c0_i32 = arith.constant 0 : i32
    %c0_i32_0 = arith.constant 0 : i32
    return %1, %c0_i32 : i32, i32
  }
  func.func @transform_1(%arg0: i32, %arg1: i32) -> (i32, i32) {
    %c0_i32 = arith.constant 0 : i32
    %c0_i32_0 = arith.constant 0 : i32
    %c0_i32_1 = arith.constant 0 : i32
    return %c0_i32, %c0_i32_0 : i32, i32
  }
  func.func @transform_2(%arg0: i32, %arg1: i32) -> (i32, i32) {
    %c4_i32 = arith.constant 4 : i32
    %0 = arith.muli %arg0, %c4_i32 : i32
    %1 = arith.addi %0, %arg1 : i32
    %c0_i32 = arith.constant 0 : i32
    %c0_i32_0 = arith.constant 0 : i32
    return %1, %c0_i32 : i32, i32
  }
  func.func @transform_3(%arg0: i32, %arg1: i32) -> (i32, i32) {
    %c0_i32 = arith.constant 0 : i32
    %c0_i32_0 = arith.constant 0 : i32
    %c0_i32_1 = arith.constant 0 : i32
    return %c0_i32, %c0_i32_0 : i32, i32
  }
  func.func @transform_4(%arg0: i32, %arg1: i32) -> (i32, i32, i32) {
    %c0_i32 = arith.constant 0 : i32
    %c0_i32_0 = arith.constant 0 : i32
    %c0_i32_1 = arith.constant 0 : i32
    return %arg0, %c0_i32, %c0_i32_0 : i32, i32, i32
  }
}

</mosaic_0001>

<llo_original>
// kernel: tpu_custom_call.1
$region0: #{tpu_custom_call.1}
  #allocation0 [shape = 'u32[]', space=smem, size = 0x4, offset = 0x4, fixed_abs, tag = 'smem constant byte address 0x4 - core index']
  #allocation1 [shape = 'u32[72,128]{1,0:T(1,128)}', space=vmem, size = 0x9000, scoped, tag = 'internal scratch']
  %s0 = inlined_call_operand.vmem [shape: f32[64,32], index: 0, kind: input, shape index: {}]
  %s1 = inlined_call_operand.hbm [shape: f32[32,768], index: 1, kind: input, shape index: {}]
  %s2 = inlined_call_operand.vmem [shape: s32[64,1], index: 2, kind: input, shape index: {}]
  %s3 = inlined_call_operand.vmem [shape: f32[1,256], index: 3, kind: input, shape index: {}]
  %s4 = inlined_call_operand.vmem [shape: f32[2,1,1], index: 4, kind: output, shape index: {}]
  %s5 = sld [smem:[#allocation0]]
  $region57: #{tpu_custom_call.1} parent=0
    _
  %s7 = ssub.s32 1, %s5
  %s8 = scalar_select 0, %s7, %s5
  $region1: #{tpu_custom_call.1} parent=0
    #allocation2 [shape = 'u8[98304]{0}', space=vmem, size = 0x18000, scoped, tag = 'input window, operand 1, single buffered']
    #allocation3 [shape = 's32[2]{0}', space=sflag, size = 0x8, scoped, tag = 'scoped memory for tpu_custom_call.1']
    %9 = vsyncpa [#allocation3], 0
    loop: start=0, step=1, limit=10
    $region2: #{tpu_custom_call.1} parent=1 // loop_pre_header
      _
    $region3: #{tpu_custom_call.1} parent=1 // loop_header
      %s11 = sphi 0, %s15
      %p12 = scmp.ge.s32.totalorder %s11, 10
      %s18 = sphi 0, %s30
      %s19 = sphi 0, %s26
      %s20 = sphi 0, %s18
      %s21 = sphi 0, %s19
      %s22 = sphi 0, %s20
      %s23 = sphi 0, %s21
      %s37 = sphi 0, %s39
      %s40 = sphi 0, %s37
      %s41 = sphi 0, %s40
      %s57 = sphi 0, %s41
      %s61 = sphi 0, %s61
      %s63 = sphi 0, %s61
      %s64 = sphi 0, %s63
      %s78 = sphi 0, %s64
      %s88 = sphi 0, %s90
      %s91 = sphi 0, %s88
      %s92 = sphi 0, %s91
      %s108 = sphi 0, %s92
      %s112 = sphi 0, %s112
      %s114 = sphi 0, %s112
      %s115 = sphi 0, %s114
      %s129 = sphi 0, %s115
      %s135 = sphi 0, %s137
      %s138 = sphi 0, %s135
      %s139 = sphi 0, %s138
      %s155 = sphi 0, %s139
    $region4: #{tpu_custom_call.1} parent=1 // loop_header_branch
      %14 = sbr.rel (%p12) target = $region8
    $region5: #{tpu_custom_call.1} parent=1 // loop_body
      %s16 = ssub.s32 %s11, 1
      %s17 = ssub.s32 %s11, 2
      %s24 = sadd.s32 1, %s19
      %p25 = scmp.ge.s32.totalorder %s24, 4
      %s26 = scalar_select %p25, 0, %s24
      %s27 = sadd.s32 1, %s18
      %s28 = scalar_select %p25, %s27, %s18
      %p29 = scmp.ge.s32.totalorder %s28, 2
      %s30 = scalar_select %p29, 0, %s28
      %s31 = smul.u32 %s18, 4
      %s32 = sadd.s32 %s31, %s19
      %s33 = smul.u32 %s30, 4
      %s34 = sadd.s32 %s33, %s26
      %s35 = ssub.s32 %s32, %s34
      %p36 = scmp.eq.s32.totalorder %s35, 0
      %s38 = sadd.s32 %s37, 1
      %s39 = scalar_select %p36, %s37, %s38
      %p42 = pneg %p36
      %p43 = scmp.eq.s32.totalorder %s11, 7
      %p44 = por %p42, %p43
      %p45 = scmp.ne.s32.totalorder %s37, %s40
      %p46 = scmp.eq.s32.totalorder %s11, 0
      %p47 = por %p45, %p46
      %p48 = scmp.ne.s32.totalorder %s37, %s40
      %p49 = scmp.eq.s32.totalorder %s16, 7
      %p50 = por %p48, %p49
      %p51 = scmp.ne.s32.totalorder %s40, %s41
      %p52 = scmp.eq.s32.totalorder %s16, 0
      %p53 = por %p51, %p52
      %p54 = scmp.ne.s32.totalorder %s40, %s41
      %p55 = scmp.eq.s32.totalorder %s17, 7
      %p56 = por %p54, %p55
      %p58 = scmp.ne.s32.totalorder %s41, %s57
      %p59 = scmp.eq.s32.totalorder %s17, 0
      %p60 = por %p58, %p59
      %s62 = sadd.s32 %s61, 1
      %p65 = scmp.eq.s32.totalorder %s11, 7
      %p66 = scmp.ne.s32.totalorder %s61, %s63
      %p67 = scmp.eq.s32.totalorder %s11, 0
      %p68 = por %p66, %p67
      %p69 = scmp.ne.s32.totalorder %s61, %s63
      %p70 = scmp.eq.s32.totalorder %s16, 7
      %p71 = por %p69, %p70
      %p72 = scmp.ne.s32.totalorder %s63, %s64
      %p73 = scmp.eq.s32.totalorder %s16, 0
      %p74 = por %p72, %p73
      %p75 = scmp.ne.s32.totalorder %s63, %s64
      %p76 = scmp.eq.s32.totalorder %s17, 7
      %p77 = por %p75, %p76
      %p79 = scmp.ne.s32.totalorder %s64, %s78
      %p80 = scmp.eq.s32.totalorder %s17, 0
      %p81 = por %p79, %p80
      %s82 = smul.u32 %s18, 4
      %s83 = sadd.s32 %s82, %s19
      %s84 = smul.u32 %s30, 4
      %s85 = sadd.s32 %s84, %s26
      %s86 = ssub.s32 %s83, %s85
      %p87 = scmp.eq.s32.totalorder %s86, 0
      %s89 = sadd.s32 %s88, 1
      %s90 = scalar_select %p87, %s88, %s89
      %p93 = pneg %p87
      %p94 = scmp.eq.s32.totalorder %s11, 7
      %p95 = por %p93, %p94
      %p96 = scmp.ne.s32.totalorder %s88, %s91
      %p97 = scmp.eq.s32.totalorder %s11, 0
      %p98 = por %p96, %p97
      %p99 = scmp.ne.s32.totalorder %s88, %s91
      %p100 = scmp.eq.s32.totalorder %s16, 7
      %p101 = por %p99, %p100
      %p102 = scmp.ne.s32.totalorder %s91, %s92
      %p103 = scmp.eq.s32.totalorder %s16, 0
      %p104 = por %p102, %p103
      %p105 = scmp.ne.s32.totalorder %s91, %s92
      %p106 = scmp.eq.s32.totalorder %s17, 7
      %p107 = por %p105, %p106
      %p109 = scmp.ne.s32.totalorder %s92, %s108
      %p110 = scmp.eq.s32.totalorder %s17, 0
      %p111 = por %p109, %p110
      %s113 = sadd.s32 %s112, 1
      %p116 = scmp.eq.s32.totalorder %s11, 7
      %p117 = scmp.ne.s32.totalorder %s112, %s114
      %p118 = scmp.eq.s32.totalorder %s11, 0
      %p119 = por %p117, %p118
      %p120 = scmp.ne.s32.totalorder %s112, %s114
      %p121 = scmp.eq.s32.totalorder %s16, 7
      %p122 = por %p120, %p121
      %p123 = scmp.ne.s32.totalorder %s114, %s115
      %p124 = scmp.eq.s32.totalorder %s16, 0
      %p125 = por %p123, %p124
      %p126 = scmp.ne.s32.totalorder %s114, %s115
      %p127 = scmp.eq.s32.totalorder %s17, 7
      %p128 = por %p126, %p127
      %p130 = scmp.ne.s32.totalorder %s115, %s129
      %p131 = scmp.eq.s32.totalorder %s17, 0
      %p132 = por %p130, %p131
      %s133 = ssub.s32 %s18, %s30
      %p134 = scmp.eq.s32.totalorder %s133, 0
      %s136 = sadd.s32 %s135, 1
      %s137 = scalar_select %p134, %s135, %s136
      %p140 = pneg %p134
      %p141 = scmp.eq.s32.totalorder %s11, 7
      %p142 = por %p140, %p141
      %p143 = scmp.ne.s32.totalorder %s135, %s138
      %p144 = scmp.eq.s32.totalorder %s11, 0
      %p145 = por %p143, %p144
      %p146 = scmp.ne.s32.totalorder %s135, %s138
      %p147 = scmp.eq.s32.totalorder %s16, 7
      %p148 = por %p146, %p147
      %p149 = scmp.ne.s32.totalorder %s138, %s139
      %p150 = scmp.eq.s32.totalorder %s16, 0
      %p151 = por %p149, %p150
      %p152 = scmp.ne.s32.totalorder %s138, %s139
      %p153 = scmp.eq.s32.totalorder %s17, 7
      %p154 = por %p152, %p153
      %p156 = scmp.ne.s32.totalorder %s139, %s155
      %p157 = scmp.eq.s32.totalorder %s17, 0
      %p158 = por %p156, %p157
      %p159 = scmp.le.s32.totalorder 1, %s11
      %p160 = scmp.lt.s32.totalorder %s11, 9
      %p161 = pnand %p159, %p160
      %p162 = pneg %p161
      // Predicated region
      $region9: #{tpu_custom_call.1} parent=5 // pred_check
        _
      $region10: #{tpu_custom_call.1} parent=5 // pred_check_branch
        %164 = sbr.rel (%p161) target = $region12
      $region11: #{tpu_custom_call.1} parent=5 // pred_region
        %s165 = ssub.s32 %s11, 1
        // Predicated region
        $region13: #{tpu_custom_call.1} parent=11 // pred_check
          %p166 = pneg %p74
        $region14: #{tpu_custom_call.1} parent=11 // pred_check_branch
          %168 = sbr.rel (%p166) target = $region16
        $region15: #{tpu_custom_call.1} parent=11 // pred_region
          %170 = vsyncadd [#allocation3], 0
          %s171 = sshll.u32 %s1, 4
          %s172 = int_to_ptr.hbm [resolvable:$true] %s171
          %s173 = sshll.u32 [#allocation2], 4
          %s174 = int_to_ptr.vmem [resolvable:$true] %s173
          %179 = dma.hbm_to_vmem [thread:$0]  %s172, 3072, %s174, [#allocation3], 768, 768, 48
        $region16: #{tpu_custom_call.1} parent=11 // pred_fallthru
          _
        // Predicated region
        $region17: #{tpu_custom_call.1} parent=11 // pred_check
          %p180 = pneg %p125
        $region18: #{tpu_custom_call.1} parent=11 // pred_check_branch
          %182 = sbr.rel (%p180) target = $region20
        $region19: #{tpu_custom_call.1} parent=11 // pred_region
          _
        $region20: #{tpu_custom_call.1} parent=11 // pred_fallthru
          _
      $region12: #{tpu_custom_call.1} parent=5 // pred_fallthru
        _
      %p183 = scmp.lt.s32.totalorder %s11, 8
      // Predicated region
      $region21: #{tpu_custom_call.1} parent=5 // pred_check
        %p184 = pneg %p183
      $region22: #{tpu_custom_call.1} parent=5 // pred_check_branch
        %186 = sbr.rel (%p184) target = $region24
      $region23: #{tpu_custom_call.1} parent=5 // pred_region
        // Predicated region
        $region25: #{tpu_custom_call.1} parent=23 // pred_check
          %p187 = pneg %p47
        $region26: #{tpu_custom_call.1} parent=23 // pred_check_branch
          %189 = sbr.rel (%p187) target = $region28
        $region27: #{tpu_custom_call.1} parent=23 // pred_region
          %s190 = smul.u32 %s18, 4
          %s191 = sadd.s32 %s190, %s19
          %p192 = scmp.lt.s32.totalorder %s191, 7
          %s193 = scalar_select %p192, %s191, 7
          %s194 = smul.addr %s193, 8
          %s195 = scalar_lea.vmem %s0, %s194
          %s196 = smul.u32 %s18, 4
          %s197 = sadd.s32 %s196, %s19
        $region28: #{tpu_custom_call.1} parent=23 // pred_fallthru
          _
        // Predicated region
        $region29: #{tpu_custom_call.1} parent=23 // pred_check
          %p198 = pneg %p98
        $region30: #{tpu_custom_call.1} parent=23 // pred_check_branch
          %200 = sbr.rel (%p198) target = $region32
        $region31: #{tpu_custom_call.1} parent=23 // pred_region
          %s201 = smul.u32 %s18, 4
          %s202 = sadd.s32 %s201, %s19
          %p203 = scmp.lt.s32.totalorder %s202, 7
          %s204 = scalar_select %p203, %s202, 7
          %s205 = smul.addr %s204, 8
          %s206 = scalar_lea.vmem %s2, %s205
          %s207 = smul.u32 %s18, 4
          %s208 = sadd.s32 %s207, %s19
        $region32: #{tpu_custom_call.1} parent=23 // pred_fallthru
          _
      $region24: #{tpu_custom_call.1} parent=5 // pred_fallthru
        _
      %p209 = scmp.le.s32.totalorder 1, %s11
      %p210 = scmp.lt.s32.totalorder %s11, 9
      %p211 = pnand %p209, %p210
      %p212 = pneg %p211
      // Predicated region
      $region33: #{tpu_custom_call.1} parent=5 // pred_check
        _
      $region34: #{tpu_custom_call.1} parent=5 // pred_check_branch
        %214 = sbr.rel (%p211) target = $region36
      $region35: #{tpu_custom_call.1} parent=5 // pred_region
        %s215 = ssub.s32 %s11, 1
        // Predicated region
        $region37: #{tpu_custom_call.1} parent=35 // pred_check
          %p216 = pneg %p74
        $region38: #{tpu_custom_call.1} parent=35 // pred_check_branch
          %218 = sbr.rel (%p216) target = $region40
        $region39: #{tpu_custom_call.1} parent=35 // pred_region
          %220 = dma.done [#allocation3], 3072
        $region40: #{tpu_custom_call.1} parent=35 // pred_fallthru
          _
        %s221 = smul.u32 %s20, 4
        %s222 = sadd.s32 %s221, %s21
        %p223 = scmp.lt.s32.totalorder %s222, 7
        %s224 = scalar_select %p223, %s222, 7
        %s225 = smul.addr %s224, 8
        %s226 = scalar_lea.vmem %s0, %s225
        %p227 = pneg %p53
        %p228 = pneg %p50
        %p229 = pneg %p74
        %p230 = pneg %p71
        %s231 = smul.u32 %s20, 4
        %s232 = sadd.s32 %s231, %s21
        %p233 = scmp.lt.s32.totalorder %s232, 7
        %s234 = scalar_select %p233, %s232, 7
        %s235 = smul.addr %s234, 8
        %s236 = scalar_lea.vmem %s2, %s235
        %p237 = pneg %p104
        %p238 = pneg %p101
        %p239 = pneg %p125
        %p240 = pneg %p122
        %p241 = pneg %p151
        %p242 = pneg %p148
        %p243 = scmp.lt.s32.totalorder %s20, 1
        %s244 = scalar_select %p243, %s20, 1
        %s245 = scalar_lea.vmem %s4, %s244
        %s246 = smul.u32 %s20, 4
        %s247 = sadd.s32 %s246, %s21
        %p248 = scmp.lt.s32.totalorder %s247, 7
        %s249 = scalar_select %p248, %s247, 7
        %s250 = smul.addr %s249, 8
        %s251 = scalar_lea.vmem %s0, %s250
        %s252 = smul.u32 %s20, 4
        %s253 = sadd.s32 %s252, %s21
        %s254 = smul.u32 %s20, 4
        %s255 = sadd.s32 %s254, %s21
        %p256 = scmp.lt.s32.totalorder %s255, 7
        %s257 = scalar_select %p256, %s255, 7
        %s258 = smul.addr %s257, 8
        %s259 = scalar_lea.vmem %s2, %s258
        %s260 = smul.u32 %s20, 4
        %s261 = sadd.s32 %s260, %s21
        %p262 = scmp.lt.s32.totalorder %s20, 1
        %s263 = scalar_select %p262, %s20, 1
        %s264 = scalar_lea.vmem %s4, %s263
        %p265 = scmp.eq.s32.totalorder %s21, 0
        // Predicated region
        $region41: #{tpu_custom_call.1} parent=35 // pred_check
          %p266 = pneg %p265
        $region42: #{tpu_custom_call.1} parent=35 // pred_check_branch
          %268 = sbr.rel (%p266) target = $region44
        $region43: #{tpu_custom_call.1} parent=35 // pred_region
          %vm269 = vcmask 0
          %270 = vst.msk [vmem:[%s264] sm:$0x1] %vm269, 0.0
        $region44: #{tpu_custom_call.1} parent=35 // pred_fallthru
          _
        %v271 = vld [vmem:[%s251] sm:$0xff]
        %v272 = vld [vmem:[#allocation2] sm:$0xff]
        %v273 = vld [vmem:[#allocation2 + $0x8] sm:$0xff]
        %v274 = vld [vmem:[#allocation2 + $0x30] sm:$0xff]
        %v275 = vld [vmem:[#allocation2 + $0x38] sm:$0xff]
        %v276 = vld [vmem:[#allocation2 + $0x60] sm:$0xff]
        %v277 = vld [vmem:[#allocation2 + $0x68] sm:$0xff]
        %v278 = vld [vmem:[#allocation2 + $0x90] sm:$0xff]
        %v279 = vld [vmem:[#allocation2 + $0x98] sm:$0xff]
        %vm280 = vcmask 261120
        %v282 = vsel %vm280, %v271, 0
        %284 = vmatpush.msra.mxu0 0.0
        %285 = vmatpush.msra.mxu0 0.0
        %286 = vmatpush.msra.mxu0 0.0
        %287 = vmatpush.msra.mxu0 0.0
        %288 = vmatpush.msra.mxu0 0.0
        %289 = vmatpush.msra.mxu0 0.0
        %290 = vmatpush.msra.mxu0 0.0
        %291 = vmatpush.msra.mxu0 0.0
        %292 = vmatpush.msra.mxu0 0.0
        %293 = vmatpush.msra.mxu0 0.0
        %294 = vmatpush.msra.mxu0 0.0
        %295 = vmatpush.msra.mxu0 0.0
        %296 = vmatpush.msra.mxu0 %v278
        %297 = vmatpush.msra.mxu0 %v276
        %298 = vmatpush.msra.mxu0 %v274
        %299 = vmatpush.msra.mxu0 %v272
        %300 = vmatmul.f32.gmra.mxu0 %v282
        %v301 = vpop.f32.mrf.mxu0
        %v302 = vadd.f32 0.0, %v301
        %303 = vdwg.mxu0
        %304 = vmatpush.msra.mxu0 0.0
        %305 = vmatpush.msra.mxu0 0.0
        %306 = vmatpush.msra.mxu0 0.0
        %307 = vmatpush.msra.mxu0 0.0
        %308 = vmatpush.msra.mxu0 0.0
        %309 = vmatpush.msra.mxu0 0.0
        %310 = vmatpush.msra.mxu0 0.0
        %311 = vmatpush.msra.mxu0 0.0
        %312 = vmatpush.msra.mxu0 0.0
        %313 = vmatpush.msra.mxu0 0.0
        %314 = vmatpush.msra.mxu0 0.0
        %315 = vmatpush.msra.mxu0 0.0
        %316 = vmatpush.msra.mxu0 %v279
        %317 = vmatpush.msra.mxu0 %v277
        %318 = vmatpush.msra.mxu0 %v275
        %319 = vmatpush.msra.mxu0 %v273
        %320 = vmatmul.f32.gmra.mxu0 %v282
        %v321 = vpop.f32.mrf.mxu0
        %v322 = vadd.f32 0.0, %v321
        %323 = vdwg.mxu0
        %v324 = vmul.f32 %v302, 10.0
        %v325 = vmul.f32 %v322, 10.0
        %v326 = vld [vmem:[#allocation2 + $0x10] sm:$0xff]
        %v327 = vld [vmem:[#allocation2 + $0x18] sm:$0xff]
        %v328 = vld [vmem:[#allocation2 + $0x40] sm:$0xff]
        %v329 = vld [vmem:[#allocation2 + $0x48] sm:$0xff]
        %v330 = vld [vmem:[#allocation2 + $0x70] sm:$0xff]
        %v331 = vld [vmem:[#allocation2 + $0x78] sm:$0xff]
        %v332 = vld [vmem:[#allocation2 + $0xa0] sm:$0xff]
        %v333 = vld [vmem:[#allocation2 + $0xa8] sm:$0xff]
        %334 = vmatpush.msra.mxu0 0.0
        %335 = vmatpush.msra.mxu0 0.0
        %336 = vmatpush.msra.mxu0 0.0
        %337 = vmatpush.msra.mxu0 0.0
        %338 = vmatpush.msra.mxu0 0.0
        %339 = vmatpush.msra.mxu0 0.0
        %340 = vmatpush.msra.mxu0 0.0
        %341 = vmatpush.msra.mxu0 0.0
        %342 = vmatpush.msra.mxu0 0.0
        %343 = vmatpush.msra.mxu0 0.0
        %344 = vmatpush.msra.mxu0 0.0
        %345 = vmatpush.msra.mxu0 0.0
        %346 = vmatpush.msra.mxu0 %v332
        %347 = vmatpush.msra.mxu0 %v330
        %348 = vmatpush.msra.mxu0 %v328
        %349 = vmatpush.msra.mxu0 %v326
        %350 = vmatmul.f32.gmra.mxu0 %v282
        %v351 = vpop.f32.mrf.mxu0
        %v352 = vadd.f32 0.0, %v351
        %353 = vdwg.mxu0
        %354 = vmatpush.msra.mxu0 0.0
        %355 = vmatpush.msra.mxu0 0.0
        %356 = vmatpush.msra.mxu0 0.0
        %357 = vmatpush.msra.mxu0 0.0
        %358 = vmatpush.msra.mxu0 0.0
        %359 = vmatpush.msra.mxu0 0.0
        %360 = vmatpush.msra.mxu0 0.0
        %361 = vmatpush.msra.mxu0 0.0
        %362 = vmatpush.msra.mxu0 0.0
        %363 = vmatpush.msra.mxu0 0.0
        %364 = vmatpush.msra.mxu0 0.0
        %365 = vmatpush.msra.mxu0 0.0
        %366 = vmatpush.msra.mxu0 %v333
        %367 = vmatpush.msra.mxu0 %v331
        %368 = vmatpush.msra.mxu0 %v329
        %369 = vmatpush.msra.mxu0 %v327
        %370 = vmatmul.f32.gmra.mxu0 %v282
        %v371 = vpop.f32.mrf.mxu0
        %v372 = vadd.f32 0.0, %v371
        %373 = vdwg.mxu0
        %v374 = vmul.f32 %v352, 10.0
        %v375 = vmul.f32 %v372, 10.0
        %v376 = vmax.f32 %v324, %v374
        %v377 = vmax.f32 %v325, %v375
        %v378 = vsub.f32 %v324, %v376
        %v379 = vsub.f32 %v325, %v377
        %v380 = vmul.f32 %v378, 1.442695
        %v381 = vpow.pop %v380
        %v382 = vmul.f32 %v379, 1.442695
        %v383 = vpow.pop %v382
        %v384 = vsub.f32 %v374, %v376
        %v385 = vsub.f32 %v375, %v377
        %v386 = vmul.f32 %v384, 1.442695
        %v387 = vpow.pop %v386
        %v388 = vmul.f32 %v385, 1.442695
        %v389 = vpow.pop %v388
        %v390 = vadd.f32 %v381, %v387
        %v391 = vadd.f32 %v383, %v389
        %v392 = vmul.f32 %v324, %v381
        %v393 = vmul.f32 %v325, %v383
        %v394 = vmul.f32 %v387, %v374
        %v395 = vmul.f32 %v389, %v375
        %v396 = vadd.f32 %v392, %v394
        %v397 = vadd.f32 %v393, %v395
        %v398 = vld [vmem:[#allocation2 + $0x20] sm:$0xff]
        %v399 = vld [vmem:[#allocation2 + $0x28] sm:$0xff]
        %v400 = vld [vmem:[#allocation2 + $0x50] sm:$0xff]
        %v401 = vld [vmem:[#allocation2 + $0x58] sm:$0xff]
        %v402 = vld [vmem:[#allocation2 + $0x80] sm:$0xff]
        %v403 = vld [vmem:[#allocation2 + $0x88] sm:$0xff]
        %v404 = vld [vmem:[#allocation2 + $0xb0] sm:$0xff]
        %v405 = vld [vmem:[#allocation2 + $0xb8] sm:$0xff]
        %406 = vmatpush.msra.mxu0 0.0
        %407 = vmatpush.msra.mxu0 0.0
        %408 = vmatpush.msra.mxu0 0.0
        %409 = vmatpush.msra.mxu0 0.0
        %410 = vmatpush.msra.mxu0 0.0
        %411 = vmatpush.msra.mxu0 0.0
        %412 = vmatpush.msra.mxu0 0.0
        %413 = vmatpush.msra.mxu0 0.0
        %414 = vmatpush.msra.mxu0 0.0
        %415 = vmatpush.msra.mxu0 0.0
        %416 = vmatpush.msra.mxu0 0.0
        %417 = vmatpush.msra.mxu0 0.0
        %418 = vmatpush.msra.mxu0 %v404
        %419 = vmatpush.msra.mxu0 %v402
        %420 = vmatpush.msra.mxu0 %v400
        %421 = vmatpush.msra.mxu0 %v398
        %422 = vmatmul.f32.gmra.mxu0 %v282
        %v423 = vpop.f32.mrf.mxu0
        %v424 = vadd.f32 0.0, %v423
        %425 = vdwg.mxu0
        %426 = vmatpush.msra.mxu0 0.0
        %427 = vmatpush.msra.mxu0 0.0
        %428 = vmatpush.msra.mxu0 0.0
        %429 = vmatpush.msra.mxu0 0.0
        %430 = vmatpush.msra.mxu0 0.0
        %431 = vmatpush.msra.mxu0 0.0
        %432 = vmatpush.msra.mxu0 0.0
        %433 = vmatpush.msra.mxu0 0.0
        %434 = vmatpush.msra.mxu0 0.0
        %435 = vmatpush.msra.mxu0 0.0
        %436 = vmatpush.msra.mxu0 0.0
        %437 = vmatpush.msra.mxu0 0.0
        %438 = vmatpush.msra.mxu0 %v405
        %439 = vmatpush.msra.mxu0 %v403
        %440 = vmatpush.msra.mxu0 %v401
        %441 = vmatpush.msra.mxu0 %v399
        %442 = vmatmul.f32.gmra.mxu0 %v282
        %v443 = vpop.f32.mrf.mxu0
        %v444 = vadd.f32 0.0, %v443
        %445 = vdwg.mxu0
        %v446 = vmul.f32 %v424, 10.0
        %v447 = vmul.f32 %v444, 10.0
        %v448 = vmax.f32 %v376, %v446
        %v449 = vmax.f32 %v377, %v447
        %v450 = vsub.f32 %v376, %v448
        %v451 = vsub.f32 %v377, %v449
        %v452 = vmul.f32 %v450, 1.442695
        %v453 = vpow.pop %v452
        %v454 = vmul.f32 %v451, 1.442695
        %v455 = vpow.pop %v454
        %v456 = vsub.f32 %v446, %v448
        %v457 = vsub.f32 %v447, %v449
        %v458 = vmul.f32 %v456, 1.442695
        %v459 = vpow.pop %v458
        %v460 = vmul.f32 %v457, 1.442695
        %v461 = vpow.pop %v460
        %v462 = vmul.f32 %v390, %v453
        %v463 = vmul.f32 %v391, %v455
        %v464 = vadd.f32 %v462, %v459
        %v465 = vadd.f32 %v463, %v461
        %v466 = vmul.f32 %v396, %v453
        %v467 = vmul.f32 %v397, %v455
        %v468 = vmul.f32 %v459, %v446
        %v469 = vmul.f32 %v461, %v447
        %v470 = vadd.f32 %v466, %v468
        %v471 = vadd.f32 %v467, %v469
        %v472 = vrcp.pop %v464
        %v473 = vmul.f32 %v464, %v472
        %v474 = vsub.f32 1.0, %v473
        %v475 = vmul.f32 %v472, %v474
        %v476 = vadd.f32 %v472, %v475
        %vm477 = vweird.f32 %v464
        %vm478 = vweird.f32 %v472
        %vm479 = vmor %vm477, %vm478
        %v480 = vsel %vm479, %v472, %v476
        %v481 = vand.u32 2147483647, %v464
        %vm482 = vcmp.eq.f32.partialorder %v481, 8.507059e+37
        %v483 = vand.u32 %v464, 2147483648
        %v484 = vor.u32 1.1754944e-38, %v483
        %v485 = vsel %vm482, %v484, %v480
        %v486 = vrcp.pop %v465
        %v487 = vmul.f32 %v465, %v486
        %v488 = vsub.f32 1.0, %v487
        %v489 = vmul.f32 %v486, %v488
        %v490 = vadd.f32 %v486, %v489
        %vm491 = vweird.f32 %v465
        %vm492 = vweird.f32 %v486
        %vm493 = vmor %vm491, %vm492
        %v494 = vsel %vm493, %v486, %v490
        %v495 = vand.u32 2147483647, %v465
        %vm496 = vcmp.eq.f32.partialorder %v495, 8.507059e+37
        %v497 = vand.u32 %v465, 2147483648
        %v498 = vor.u32 1.1754944e-38, %v497
        %v499 = vsel %vm496, %v498, %v494
        %v500 = vmul.f32 %v470, %v485
        %v501 = vmul.f32 %v471, %v499
        %v502 = vld [vmem:[%s259] sm:$0xff]
        %v503 = vlaneseq
        %v504 = vand.u32 %v503, 127
        %v505 = vadd.s32 %v504, 128
        %506 = vset.pattern.permute.xlu0 0
        %507 = vperm.xlu0 %506, %v502
        %v508 = vpop.permute.xlu0 %507
        %vm509 = vcmp.eq.s32.totalorder %v504, %v508
        %vm510 = vcmp.eq.s32.totalorder %v505, %v508
        %v511 = vsel %vm509, 1, 0
        %v512 = vsel %vm510, 1, 0
        %v513 = vcvt.s32.f32 %v511
        %v514 = vcvt.s32.f32 %v512
        %v515 = vmul.f32 %v513, 0.1
        %v516 = vmul.f32 %v514, 0.1
        %v517 = vsub.f32 %v500, %v515
        %v518 = vsub.f32 %v501, %v516
        %v519 = vld [vmem:[%s3] sm:$0x3]
        %v521 = vperm.slane %v519, 0
        %v522 = vperm.slane %v519, 1
        %v525 = vadd.f32 %v517, %v521
        %v526 = vadd.f32 %v518, %v522
        %v527 = vmax.f32 %v525, %v526
        %528 = vmax.xlane.f32.xlu0 %v527
        %v529 = vpop.xlane.xlu0 %528
        %v530 = vsub.f32 %v525, %v529
        %v531 = vsub.f32 %v526, %v529
        %v532 = vmul.f32 %v530, 1.442695
        %v533 = vpow.pop %v532
        %v534 = vmul.f32 %v531, 1.442695
        %v535 = vpow.pop %v534
        %v536 = vadd.f32 %v533, %v535
        %537 = vadd.xlane.f32.xlu0 %v536
        %v538 = vpop.xlane.xlu0 %537
        %v539 = vlog2.pop %v538
        %v540 = vmul.f32 %v539, 0.6931472
        %v541 = vadd.f32 %v540, %v529
        %v542 = vmul.f32 %v525, %v513
        %v543 = vmul.f32 %v526, %v514
        %v544 = vadd.f32 %v542, %v543
        %545 = vadd.xlane.f32.xlu0 %v544
        %v546 = vpop.xlane.xlu0 %545
        %s547 = smul.u32 %s20, 4
        %s548 = sadd.s32 %s547, %s21
        %s549 = smul.u32 %s548, 8
        %v550 = vlaneseq
        %v551 = vshrl.u32 %v550, 7
        %v552 = vstv %s549
        %v553 = vadd.s32 %v552, %v551
        %vm554 = vcmp.lt.s32.totalorder %v553, 64
        %v555 = vsel %vm554, 1, 0
        %v556 = vcvt.s32.f32 %v555
        %v557 = vld [vmem:[%s264] sm:$0x1]
        %v558 = vsub.f32 %v541, %v546
        %v559 = vmul.f32 %v558, %v556
        %vm560 = vcmask 7168
        %v561 = vsel %vm560, %v559, 0.0
        %562 = vadd.xlane.f32.xlu0 %v561
        %v563 = vpop.xlane.xlu0 %562
        %v564 = vrot.slane %v563, 4
        %v565 = vadd.f32 %v563, %v564
        %v566 = vrot.slane %v565, 2
        %v567 = vadd.f32 %v565, %v566
        %v568 = vrot.slane %v567, 1
        %v569 = vadd.f32 %v567, %v568
        %s570 = vtos %v569
        %v571 = vstv %s570
        %v572 = vadd.f32 %v557, %v571
        %vm573 = vcmask 0
        %574 = vst.msk [vmem:[%s264] sm:$0x1] %vm573, %v572
        %p575 = scmp.lt.s32.totalorder %s20, 1
        %s576 = scalar_select %p575, %s20, 1
        %s577 = scalar_lea.vmem %s4, %s576
        // Predicated region
        $region45: #{tpu_custom_call.1} parent=35 // pred_check
          %p578 = pneg %p148
        $region46: #{tpu_custom_call.1} parent=35 // pred_check_branch
          %580 = sbr.rel (%p578) target = $region48
        $region47: #{tpu_custom_call.1} parent=35 // pred_region
          _
        $region48: #{tpu_custom_call.1} parent=35 // pred_fallthru
          _
      $region36: #{tpu_custom_call.1} parent=5 // pred_fallthru
        _
      %p581 = scmp.le.s32.totalorder 2, %s11
      // Predicated region
      $region49: #{tpu_custom_call.1} parent=5 // pred_check
        %p582 = pneg %p581
      $region50: #{tpu_custom_call.1} parent=5 // pred_check_branch
        %584 = sbr.rel (%p582) target = $region52
      $region51: #{tpu_custom_call.1} parent=5 // pred_region
        %s585 = ssub.s32 %s11, 2
        // Predicated region
        $region53: #{tpu_custom_call.1} parent=51 // pred_check
          %p586 = pneg %p154
        $region54: #{tpu_custom_call.1} parent=51 // pred_check_branch
          %588 = sbr.rel (%p586) target = $region56
        $region55: #{tpu_custom_call.1} parent=51 // pred_region
          %p589 = scmp.lt.s32.totalorder %s22, 1
          %s590 = scalar_select %p589, %s22, 1
          %s591 = scalar_lea.vmem %s4, %s590
        $region56: #{tpu_custom_call.1} parent=51 // pred_fallthru
          _
      $region52: #{tpu_custom_call.1} parent=5 // pred_fallthru
        _
    $region6: #{tpu_custom_call.1} parent=1 // loop_footer
      %s15 = sadd.s32 1, %s11
    $region7: #{tpu_custom_call.1} parent=1 // loop_footer_branch
      %10 = sbr.rel target = $region3
    $region8: #{tpu_custom_call.1} parent=1 // loop_exit
      _
    %592 = vsyncpa [#allocation3], 1
    %s593 = scalar_lea.sflag [#allocation3], 1
    %594 = vsyncpa %s593, 1

// kernel: tpu_custom_call.1
$region0: #{tpu_custom_call.1}
  #allocation0 [shape = 'u32[]', space=smem, size = 0x4, offset = 0x4, fixed_abs, tag = 'smem constant byte address 0x4 - core index']
  #allocation1 [shape = 'u32[72,128]{1,0:T(1,128)}', space=vmem, size = 0x9000, scoped, tag = 'internal scratch']
  %s0 = inlined_call_operand.vmem [shape: f32[64,32], index: 0, kind: input, shape index: {}]
  %s1 = inlined_call_operand.hbm [shape: f32[32,768], index: 1, kind: input, shape index: {}]
  %s2 = inlined_call_operand.vmem [shape: s32[64,1], index: 2, kind: input, shape index: {}]
  %s3 = inlined_call_operand.vmem [shape: f32[1,256], index: 3, kind: input, shape index: {}]
  %s4 = inlined_call_operand.vmem [shape: f32[2,1,1], index: 4, kind: output, shape index: {}]
  %s5 = sld [smem:[#allocation0]]
  $region57: #{tpu_custom_call.1} parent=0
    _
  %s7 = ssub.s32 1, %s5
  %s8 = scalar_select 0, %s7, %s5
  $region1: #{tpu_custom_call.1} parent=0
    #allocation2 [shape = 'u8[98304]{0}', space=vmem, size = 0x18000, scoped, tag = 'input window, operand 1, single buffered']
    #allocation3 [shape = 's32[2]{0}', space=sflag, size = 0x8, scoped, tag = 'scoped memory for tpu_custom_call.1']
    %9 = vsyncpa [#allocation3], 0
    loop: start=0, step=1, limit=10
    $region2: #{tpu_custom_call.1} parent=1 // loop_pre_header
      _
    $region3: #{tpu_custom_call.1} parent=1 // loop_header
      %s11 = sphi 0, %s15
      %p12 = scmp.ge.s32.totalorder %s11, 10
      %s18 = sphi 0, %s30
      %s19 = sphi 0, %s26
      %s20 = sphi 0, %s18
      %s21 = sphi 0, %s19
      %s22 = sphi 0, %s20
      %s23 = sphi 0, %s21
      %s37 = sphi 0, %s39
      %s40 = sphi 0, %s37
      %s41 = sphi 0, %s40
      %s57 = sphi 0, %s41
      %s61 = sphi 0, %s61
      %s63 = sphi 0, %s61
      %s64 = sphi 0, %s63
      %s78 = sphi 0, %s64
      %s88 = sphi 0, %s90
      %s91 = sphi 0, %s88
      %s92 = sphi 0, %s91
      %s108 = sphi 0, %s92
      %s112 = sphi 0, %s112
      %s114 = sphi 0, %s112
      %s115 = sphi 0, %s114
      %s129 = sphi 0, %s115
      %s135 = sphi 0, %s137
      %s138 = sphi 0, %s135
      %s139 = sphi 0, %s138
      %s155 = sphi 0, %s139
    $region4: #{tpu_custom_call.1} parent=1 // loop_header_branch
      %14 = sbr.rel (%p12) target = $region8
    $region5: #{tpu_custom_call.1} parent=1 // loop_body
      %s16 = ssub.s32 %s11, 1
      %s17 = ssub.s32 %s11, 2
      %s24 = sadd.s32 1, %s19
      %p25 = scmp.ge.s32.totalorder %s24, 4
      %s26 = scalar_select %p25, 0, %s24
      %s27 = sadd.s32 1, %s18
      %s28 = scalar_select %p25, %s27, %s18
      %p29 = scmp.ge.s32.totalorder %s28, 2
      %s30 = scalar_select %p29, 0, %s28
      %s31 = smul.u32 %s18, 4
      %s32 = sadd.s32 %s31, %s19
      %s33 = smul.u32 %s30, 4
      %s34 = sadd.s32 %s33, %s26
      %s35 = ssub.s32 %s32, %s34
      %p36 = scmp.eq.s32.totalorder %s35, 0
      %s38 = sadd.s32 %s37, 1
      %s39 = scalar_select %p36, %s37, %s38
      %p42 = pneg %p36
      %p43 = scmp.eq.s32.totalorder %s11, 7
      %p44 = por %p42, %p43
      %p45 = scmp.ne.s32.totalorder %s37, %s40
      %p46 = scmp.eq.s32.totalorder %s11, 0
      %p47 = por %p45, %p46
      %p48 = scmp.ne.s32.totalorder %s37, %s40
      %p49 = scmp.eq.s32.totalorder %s16, 7
      %p50 = por %p48, %p49
      %p51 = scmp.ne.s32.totalorder %s40, %s41
      %p52 = scmp.eq.s32.totalorder %s16, 0
      %p53 = por %p51, %p52
      %p54 = scmp.ne.s32.totalorder %s40, %s41
      %p55 = scmp.eq.s32.totalorder %s17, 7
      %p56 = por %p54, %p55
      %p58 = scmp.ne.s32.totalorder %s41, %s57
      %p59 = scmp.eq.s32.totalorder %s17, 0
      %p60 = por %p58, %p59
      %s62 = sadd.s32 %s61, 1
      %p65 = scmp.eq.s32.totalorder %s11, 7
      %p66 = scmp.ne.s32.totalorder %s61, %s63
      %p67 = scmp.eq.s32.totalorder %s11, 0
      %p68 = por %p66, %p67
      %p69 = scmp.ne.s32.totalorder %s61, %s63
      %p70 = scmp.eq.s32.totalorder %s16, 7
      %p71 = por %p69, %p70
      %p72 = scmp.ne.s32.totalorder %s63, %s64
      %p73 = scmp.eq.s32.totalorder %s16, 0
      %p74 = por %p72, %p73
      %p75 = scmp.ne.s32.totalorder %s63, %s64
      %p76 = scmp.eq.s32.totalorder %s17, 7
      %p77 = por %p75, %p76
      %p79 = scmp.ne.s32.totalorder %s64, %s78
      %p80 = scmp.eq.s32.totalorder %s17, 0
      %p81 = por %p79, %p80
      %s82 = smul.u32 %s18, 4
      %s83 = sadd.s32 %s82, %s19
      %s84 = smul.u32 %s30, 4
      %s85 = sadd.s32 %s84, %s26
      %s86 = ssub.s32 %s83, %s85
      %p87 = scmp.eq.s32.totalorder %s86, 0
      %s89 = sadd.s32 %s88, 1
      %s90 = scalar_select %p87, %s88, %s89
      %p93 = pneg %p87
      %p94 = scmp.eq.s32.totalorder %s11, 7
      %p95 = por %p93, %p94
      %p96 = scmp.ne.s32.totalorder %s88, %s91
      %p97 = scmp.eq.s32.totalorder %s11, 0
      %p98 = por %p96, %p97
      %p99 = scmp.ne.s32.totalorder %s88, %s91
      %p100 = scmp.eq.s32.totalorder %s16, 7
      %p101 = por %p99, %p100
      %p102 = scmp.ne.s32.totalorder %s91, %s92
      %p103 = scmp.eq.s32.totalorder %s16, 0
      %p104 = por %p102, %p103
      %p105 = scmp.ne.s32.totalorder %s91, %s92
      %p106 = scmp.eq.s32.totalorder %s17, 7
      %p107 = por %p105, %p106
      %p109 = scmp.ne.s32.totalorder %s92, %s108
      %p110 = scmp.eq.s32.totalorder %s17, 0
      %p111 = por %p109, %p110
      %s113 = sadd.s32 %s112, 1
      %p116 = scmp.eq.s32.totalorder %s11, 7
      %p117 = scmp.ne.s32.totalorder %s112, %s114
      %p118 = scmp.eq.s32.totalorder %s11, 0
      %p119 = por %p117, %p118
      %p120 = scmp.ne.s32.totalorder %s112, %s114
      %p121 = scmp.eq.s32.totalorder %s16, 7
      %p122 = por %p120, %p121
      %p123 = scmp.ne.s32.totalorder %s114, %s115
      %p124 = scmp.eq.s32.totalorder %s16, 0
      %p125 = por %p123, %p124
      %p126 = scmp.ne.s32.totalorder %s114, %s115
      %p127 = scmp.eq.s32.totalorder %s17, 7
      %p128 = por %p126, %p127
      %p130 = scmp.ne.s32.totalorder %s115, %s129
      %p131 = scmp.eq.s32.totalorder %s17, 0
      %p132 = por %p130, %p131
      %s133 = ssub.s32 %s18, %s30
      %p134 = scmp.eq.s32.totalorder %s133, 0
      %s136 = sadd.s32 %s135, 1
      %s137 = scalar_select %p134, %s135, %s136
      %p140 = pneg %p134
      %p141 = scmp.eq.s32.totalorder %s11, 7
      %p142 = por %p140, %p141
      %p143 = scmp.ne.s32.totalorder %s135, %s138
      %p144 = scmp.eq.s32.totalorder %s11, 0
      %p145 = por %p143, %p144
      %p146 = scmp.ne.s32.totalorder %s135, %s138
      %p147 = scmp.eq.s32.totalorder %s16, 7
      %p148 = por %p146, %p147
      %p149 = scmp.ne.s32.totalorder %s138, %s139
      %p150 = scmp.eq.s32.totalorder %s16, 0
      %p151 = por %p149, %p150
      %p152 = scmp.ne.s32.totalorder %s138, %s139
      %p153 = scmp.eq.s32.totalorder %s17, 7
      %p154 = por %p152, %p153
      %p156 = scmp.ne.s32.totalorder %s139, %s155
      %p157 = scmp.eq.s32.totalorder %s17, 0
      %p158 = por %p156, %p157
      %p159 = scmp.le.s32.totalorder 1, %s11
      %p160 = scmp.lt.s32.totalorder %s11, 9
      %p161 = pnand %p159, %p160
      %p162 = pneg %p161
      // Predicated region
      $region9: #{tpu_custom_call.1} parent=5 // pred_check
        _
      $region10: #{tpu_custom_call.1} parent=5 // pred_check_branch
        %164 = sbr.rel (%p161) target = $region12
      $region11: #{tpu_custom_call.1} parent=5 // pred_region
        %s165 = ssub.s32 %s11, 1
        // Predicated region
        $region13: #{tpu_custom_call.1} parent=11 // pred_check
          %p166 = pneg %p74
        $region14: #{tpu_custom_call.1} parent=11 // pred_check_branch
          %168 = sbr.rel (%p166) target = $region16
        $region15: #{tpu_custom_call.1} parent=11 // pred_region
          %170 = vsyncadd [#allocation3], 0
          %s171 = sshll.u32 %s1, 4
          %s172 = int_to_ptr.hbm [resolvable:$true] %s171
          %s173 = sshll.u32 [#allocation2], 4
          %s174 = int_to_ptr.vmem [resolvable:$true] %s173
          %179 = dma.hbm_to_vmem [thread:$0]  %s172, 3072, %s174, [#allocation3], 768, 768, 48
        $region16: #{tpu_custom_call.1} parent=11 // pred_fallthru
          _
        // Predicated region
        $region17: #{tpu_custom_call.1} parent=11 // pred_check
          %p180 = pneg %p125
        $region18: #{tpu_custom_call.1} parent=11 // pred_check_branch
          %182 = sbr.rel (%p180) target = $region20
        $region19: #{tpu_custom_call.1} parent=11 // pred_region
          _
        $region20: #{tpu_custom_call.1} parent=11 // pred_fallthru
          _
      $region12: #{tpu_custom_call.1} parent=5 // pred_fallthru
        _
      %p183 = scmp.lt.s32.totalorder %s11, 8
      // Predicated region
      $region21: #{tpu_custom_call.1} parent=5 // pred_check
        %p184 = pneg %p183
      $region22: #{tpu_custom_call.1} parent=5 // pred_check_branch
        %186 = sbr.rel (%p184) target = $region24
      $region23: #{tpu_custom_call.1} parent=5 // pred_region
        // Predicated region
        $region25: #{tpu_custom_call.1} parent=23 // pred_check
          %p187 = pneg %p47
        $region26: #{tpu_custom_call.1} parent=23 // pred_check_branch
          %189 = sbr.rel (%p187) target = $region28
        $region27: #{tpu_custom_call.1} parent=23 // pred_region
          %s190 = smul.u32 %s18, 4
          %s191 = sadd.s32 %s190, %s19
          %p192 = scmp.lt.s32.totalorder %s191, 7
          %s193 = scalar_select %p192, %s191, 7
          %s194 = smul.addr %s193, 8
          %s195 = scalar_lea.vmem %s0, %s194
          %s196 = smul.u32 %s18, 4
          %s197 = sadd.s32 %s196, %s19
        $region28: #{tpu_custom_call.1} parent=23 // pred_fallthru
          _
        // Predicated region
        $region29: #{tpu_custom_call.1} parent=23 // pred_check
          %p198 = pneg %p98
        $region30: #{tpu_custom_call.1} parent=23 // pred_check_branch
          %200 = sbr.rel (%p198) target = $region32
        $region31: #{tpu_custom_call.1} parent=23 // pred_region
          %s201 = smul.u32 %s18, 4
          %s202 = sadd.s32 %s201, %s19
          %p203 = scmp.lt.s32.totalorder %s202, 7
          %s204 = scalar_select %p203, %s202, 7
          %s205 = smul.addr %s204, 8
          %s206 = scalar_lea.vmem %s2, %s205
          %s207 = smul.u32 %s18, 4
          %s208 = sadd.s32 %s207, %s19
        $region32: #{tpu_custom_call.1} parent=23 // pred_fallthru
          _
      $region24: #{tpu_custom_call.1} parent=5 // pred_fallthru
        _
      %p209 = scmp.le.s32.totalorder 1, %s11
      %p210 = scmp.lt.s32.totalorder %s11, 9
      %p211 = pnand %p209, %p210
      %p212 = pneg %p211
      // Predicated region
      $region33: #{tpu_custom_call.1} parent=5 // pred_check
        _
      $region34: #{tpu_custom_call.1} parent=5 // pred_check_branch
        %214 = sbr.rel (%p211) target = $region36
      $region35: #{tpu_custom_call.1} parent=5 // pred_region
        %s215 = ssub.s32 %s11, 1
        // Predicated region
        $region37: #{tpu_custom_call.1} parent=35 // pred_check
          %p216 = pneg %p74
        $region38: #{tpu_custom_call.1} parent=35 // pred_check_branch
          %218 = sbr.rel (%p216) target = $region40
        $region39: #{tpu_custom_call.1} parent=35 // pred_region
          %220 = dma.done [#allocation3], 3072
        $region40: #{tpu_custom_call.1} parent=35 // pred_fallthru
          _
        %s221 = smul.u32 %s20, 4
        %s222 = sadd.s32 %s221, %s21
        %p223 = scmp.lt.s32.totalorder %s222, 7
        %s224 = scalar_select %p223, %s222, 7
        %s225 = smul.addr %s224, 8
        %s226 = scalar_lea.vmem %s0, %s225
        %p227 = pneg %p53
        %p228 = pneg %p50
        %p229 = pneg %p74
        %p230 = pneg %p71
        %s231 = smul.u32 %s20, 4
        %s232 = sadd.s32 %s231, %s21
        %p233 = scmp.lt.s32.totalorder %s232, 7
        %s234 = scalar_select %p233, %s232, 7
        %s235 = smul.addr %s234, 8
        %s236 = scalar_lea.vmem %s2, %s235
        %p237 = pneg %p104
        %p238 = pneg %p101
        %p239 = pneg %p125
        %p240 = pneg %p122
        %p241 = pneg %p151
        %p242 = pneg %p148
        %p243 = scmp.lt.s32.totalorder %s20, 1
        %s244 = scalar_select %p243, %s20, 1
        %s245 = scalar_lea.vmem %s4, %s244
        %s246 = smul.u32 %s20, 4
        %s247 = sadd.s32 %s246, %s21
        %p248 = scmp.lt.s32.totalorder %s247, 7
        %s249 = scalar_select %p248, %s247, 7
        %s250 = smul.addr %s249, 8
        %s251 = scalar_lea.vmem %s0, %s250
        %s252 = smul.u32 %s20, 4
        %s253 = sadd.s32 %s252, %s21
        %s254 = smul.u32 %s20, 4
        %s255 = sadd.s32 %s254, %s21
        %p256 = scmp.lt.s32.totalorder %s255, 7
        %s257 = scalar_select %p256, %s255, 7
        %s258 = smul.addr %s257, 8
        %s259 = scalar_lea.vmem %s2, %s258
        %s260 = smul.u32 %s20, 4
        %s261 = sadd.s32 %s260, %s21
        %p262 = scmp.lt.s32.totalorder %s20, 1
        %s263 = scalar_select %p262, %s20, 1
        %s264 = scalar_lea.vmem %s4, %s263
        %p265 = scmp.eq.s32.totalorder %s21, 0
        // Predicated region
        $region41: #{tpu_custom_call.1} parent=35 // pred_check
          %p266 = pneg %p265
        $region42: #{tpu_custom_call.1} parent=35 // pred_check_branch
          %268 = sbr.rel (%p266) target = $region44
        $region43: #{tpu_custom_call.1} parent=35 // pred_region
          %vm269 = vcmask 0
          %270 = vst.msk [vmem:[%s264] sm:$0x1] %vm269, 0.0
        $region44: #{tpu_custom_call.1} parent=35 // pred_fallthru
          _
        %v271 = vld [vmem:[%s251] sm:$0xff]
        %v272 = vld [vmem:[#allocation2] sm:$0xff]
        %v273 = vld [vmem:[#allocation2 + $0x8] sm:$0xff]
        %v274 = vld [vmem:[#allocation2 + $0x30] sm:$0xff]
        %v275 = vld [vmem:[#allocation2 + $0x38] sm:$0xff]
        %v276 = vld [vmem:[#allocation2 + $0x60] sm:$0xff]
        %v277 = vld [vmem:[#allocation2 + $0x68] sm:$0xff]
        %v278 = vld [vmem:[#allocation2 + $0x90] sm:$0xff]
        %v279 = vld [vmem:[#allocation2 + $0x98] sm:$0xff]
        %vm280 = vcmask 261120
        %v282 = vsel %vm280, %v271, 0
        %284 = vmatpush.msra.mxu0 0.0
        %285 = vmatpush.msra.mxu0 0.0
        %286 = vmatpush.msra.mxu0 0.0
        %287 = vmatpush.msra.mxu0 0.0
        %288 = vmatpush.msra.mxu0 0.0
        %289 = vmatpush.msra.mxu0 0.0
        %290 = vmatpush.msra.mxu0 0.0
        %291 = vmatpush.msra.mxu0 0.0
        %292 = vmatpush.msra.mxu0 0.0
        %293 = vmatpush.msra.mxu0 0.0
        %294 = vmatpush.msra.mxu0 0.0
        %295 = vmatpush.msra.mxu0 0.0
        %296 = vmatpush.msra.mxu0 %v278
        %297 = vmatpush.msra.mxu0 %v276
        %298 = vmatpush.msra.mxu0 %v274
        %299 = vmatpush.msra.mxu0 %v272
        %300 = vmatmul.f32.gmra.mxu0 %v282
        %v301 = vpop.f32.mrf.mxu0
        %v302 = vadd.f32 0.0, %v301
        %303 = vdwg.mxu0
        %304 = vmatpush.msra.mxu0 0.0
        %305 = vmatpush.msra.mxu0 0.0
        %306 = vmatpush.msra.mxu0 0.0
        %307 = vmatpush.msra.mxu0 0.0
        %308 = vmatpush.msra.mxu0 0.0
        %309 = vmatpush.msra.mxu0 0.0
        %310 = vmatpush.msra.mxu0 0.0
        %311 = vmatpush.msra.mxu0 0.0
        %312 = vmatpush.msra.mxu0 0.0
        %313 = vmatpush.msra.mxu0 0.0
        %314 = vmatpush.msra.mxu0 0.0
        %315 = vmatpush.msra.mxu0 0.0
        %316 = vmatpush.msra.mxu0 %v279
        %317 = vmatpush.msra.mxu0 %v277
        %318 = vmatpush.msra.mxu0 %v275
        %319 = vmatpush.msra.mxu0 %v273
        %320 = vmatmul.f32.gmra.mxu0 %v282
        %v321 = vpop.f32.mrf.mxu0
        %v322 = vadd.f32 0.0, %v321
        %323 = vdwg.mxu0
        %v324 = vmul.f32 %v302, 10.0
        %v325 = vmul.f32 %v322, 10.0
        %v326 = vld [vmem:[#allocation2 + $0x10] sm:$0xff]
        %v327 = vld [vmem:[#allocation2 + $0x18] sm:$0xff]
        %v328 = vld [vmem:[#allocation2 + $0x40] sm:$0xff]
        %v329 = vld [vmem:[#allocation2 + $0x48] sm:$0xff]
        %v330 = vld [vmem:[#allocation2 + $0x70] sm:$0xff]
        %v331 = vld [vmem:[#allocation2 + $0x78] sm:$0xff]
        %v332 = vld [vmem:[#allocation2 + $0xa0] sm:$0xff]
        %v333 = vld [vmem:[#allocation2 + $0xa8] sm:$0xff]
        %334 = vmatpush.msra.mxu0 0.0
        %335 = vmatpush.msra.mxu0 0.0
        %336 = vmatpush.msra.mxu0 0.0
        %337 = vmatpush.msra.mxu0 0.0
        %338 = vmatpush.msra.mxu0 0.0
        %339 = vmatpush.msra.mxu0 0.0
        %340 = vmatpush.msra.mxu0 0.0
        %341 = vmatpush.msra.mxu0 0.0
        %342 = vmatpush.msra.mxu0 0.0
        %343 = vmatpush.msra.mxu0 0.0
        %344 = vmatpush.msra.mxu0 0.0
        %345 = vmatpush.msra.mxu0 0.0
        %346 = vmatpush.msra.mxu0 %v332
        %347 = vmatpush.msra.mxu0 %v330
        %348 = vmatpush.msra.mxu0 %v328
        %349 = vmatpush.msra.mxu0 %v326
        %350 = vmatmul.f32.gmra.mxu0 %v282
        %v351 = vpop.f32.mrf.mxu0
        %v352 = vadd.f32 0.0, %v351
        %353 = vdwg.mxu0
        %354 = vmatpush.msra.mxu0 0.0
        %355 = vmatpush.msra.mxu0 0.0
        %356 = vmatpush.msra.mxu0 0.0
        %357 = vmatpush.msra.mxu0 0.0
        %358 = vmatpush.msra.mxu0 0.0
        %359 = vmatpush.msra.mxu0 0.0
        %360 = vmatpush.msra.mxu0 0.0
        %361 = vmatpush.msra.mxu0 0.0
        %362 = vmatpush.msra.mxu0 0.0
        %363 = vmatpush.msra.mxu0 0.0
        %364 = vmatpush.msra.mxu0 0.0
        %365 = vmatpush.msra.mxu0 0.0
        %366 = vmatpush.msra.mxu0 %v333
        %367 = vmatpush.msra.mxu0 %v331
        %368 = vmatpush.msra.mxu0 %v329
        %369 = vmatpush.msra.mxu0 %v327
        %370 = vmatmul.f32.gmra.mxu0 %v282
        %v371 = vpop.f32.mrf.mxu0
        %v372 = vadd.f32 0.0, %v371
        %373 = vdwg.mxu0
        %v374 = vmul.f32 %v352, 10.0
        %v375 = vmul.f32 %v372, 10.0
        %v376 = vmax.f32 %v324, %v374
        %v377 = vmax.f32 %v325, %v375
        %v378 = vsub.f32 %v324, %v376
        %v379 = vsub.f32 %v325, %v377
        %v380 = vmul.f32 %v378, 1.442695
        %v381 = vpow.pop %v380
        %v382 = vmul.f32 %v379, 1.442695
        %v383 = vpow.pop %v382
        %v384 = vsub.f32 %v374, %v376
        %v385 = vsub.f32 %v375, %v377
        %v386 = vmul.f32 %v384, 1.442695
        %v387 = vpow.pop %v386
        %v388 = vmul.f32 %v385, 1.442695
        %v389 = vpow.pop %v388
        %v390 = vadd.f32 %v381, %v387
        %v391 = vadd.f32 %v383, %v389
        %v392 = vmul.f32 %v324, %v381
        %v393 = vmul.f32 %v325, %v383
        %v394 = vmul.f32 %v387, %v374
        %v395 = vmul.f32 %v389, %v375
        %v396 = vadd.f32 %v392, %v394
        %v397 = vadd.f32 %v393, %v395
        %v398 = vld [vmem:[#allocation2 + $0x20] sm:$0xff]
        %v399 = vld [vmem:[#allocation2 + $0x28] sm:$0xff]
        %v400 = vld [vmem:[#allocation2 + $0x50] sm:$0xff]
        %v401 = vld [vmem:[#allocation2 + $0x58] sm:$0xff]
        %v402 = vld [vmem:[#allocation2 + $0x80] sm:$0xff]
        %v403 = vld [vmem:[#allocation2 + $0x88] sm:$0xff]
        %v404 = vld [vmem:[#allocation2 + $0xb0] sm:$0xff]
        %v405 = vld [vmem:[#allocation2 + $0xb8] sm:$0xff]
        %406 = vmatpush.msra.mxu0 0.0
        %407 = vmatpush.msra.mxu0 0.0
        %408 = vmatpush.msra.mxu0 0.0
        %409 = vmatpush.msra.mxu0 0.0
        %410 = vmatpush.msra.mxu0 0.0
        %411 = vmatpush.msra.mxu0 0.0
        %412 = vmatpush.msra.mxu0 0.0
        %413 = vmatpush.msra.mxu0 0.0
        %414 = vmatpush.msra.mxu0 0.0
        %415 = vmatpush.msra.mxu0 0.0
        %416 = vmatpush.msra.mxu0 0.0
        %417 = vmatpush.msra.mxu0 0.0
        %418 = vmatpush.msra.mxu0 %v404
        %419 = vmatpush.msra.mxu0 %v402
        %420 = vmatpush.msra.mxu0 %v400
        %421 = vmatpush.msra.mxu0 %v398
        %422 = vmatmul.f32.gmra.mxu0 %v282
        %v423 = vpop.f32.mrf.mxu0
        %v424 = vadd.f32 0.0, %v423
        %425 = vdwg.mxu0
        %426 = vmatpush.msra.mxu0 0.0
        %427 = vmatpush.msra.mxu0 0.0
        %428 = vmatpush.msra.mxu0 0.0
        %429 = vmatpush.msra.mxu0 0.0
        %430 = vmatpush.msra.mxu0 0.0
        %431 = vmatpush.msra.mxu0 0.0
        %432 = vmatpush.msra.mxu0 0.0
        %433 = vmatpush.msra.mxu0 0.0
        %434 = vmatpush.msra.mxu0 0.0
        %435 = vmatpush.msra.mxu0 0.0
        %436 = vmatpush.msra.mxu0 0.0
        %437 = vmatpush.msra.mxu0 0.0
        %438 = vmatpush.msra.mxu0 %v405
        %439 = vmatpush.msra.mxu0 %v403
        %440 = vmatpush.msra.mxu0 %v401
        %441 = vmatpush.msra.mxu0 %v399
        %442 = vmatmul.f32.gmra.mxu0 %v282
        %v443 = vpop.f32.mrf.mxu0
        %v444 = vadd.f32 0.0, %v443
        %445 = vdwg.mxu0
        %v446 = vmul.f32 %v424, 10.0
        %v447 = vmul.f32 %v444, 10.0
        %v448 = vmax.f32 %v376, %v446
        %v449 = vmax.f32 %v377, %v447
        %v450 = vsub.f32 %v376, %v448
        %v451 = vsub.f32 %v377, %v449
        %v452 = vmul.f32 %v450, 1.442695
        %v453 = vpow.pop %v452
        %v454 = vmul.f32 %v451, 1.442695
        %v455 = vpow.pop %v454
        %v456 = vsub.f32 %v446, %v448
        %v457 = vsub.f32 %v447, %v449
        %v458 = vmul.f32 %v456, 1.442695
        %v459 = vpow.pop %v458
        %v460 = vmul.f32 %v457, 1.442695
        %v461 = vpow.pop %v460
        %v462 = vmul.f32 %v390, %v453
        %v463 = vmul.f32 %v391, %v455
        %v464 = vadd.f32 %v462, %v459
        %v465 = vadd.f32 %v463, %v461
        %v466 = vmul.f32 %v396, %v453
        %v467 = vmul.f32 %v397, %v455
        %v468 = vmul.f32 %v459, %v446
        %v469 = vmul.f32 %v461, %v447
        %v470 = vadd.f32 %v466, %v468
        %v471 = vadd.f32 %v467, %v469
        %v472 = vrcp.pop %v464
        %v473 = vmul.f32 %v464, %v472
        %v474 = vsub.f32 1.0, %v473
        %v475 = vmul.f32 %v472, %v474
        %v476 = vadd.f32 %v472, %v475
        %vm477 = vweird.f32 %v464
        %vm478 = vweird.f32 %v472
        %vm479 = vmor %vm477, %vm478
        %v480 = vsel %vm479, %v472, %v476
        %v481 = vand.u32 2147483647, %v464
        %vm482 = vcmp.eq.f32.partialorder %v481, 8.507059e+37
        %v483 = vand.u32 %v464, 2147483648
        %v484 = vor.u32 1.1754944e-38, %v483
        %v485 = vsel %vm482, %v484, %v480
        %v486 = vrcp.pop %v465
        %v487 = vmul.f32 %v465, %v486
        %v488 = vsub.f32 1.0, %v487
        %v489 = vmul.f32 %v486, %v488
        %v490 = vadd.f32 %v486, %v489
        %vm491 = vweird.f32 %v465
        %vm492 = vweird.f32 %v486
        %vm493 = vmor %vm491, %vm492
        %v494 = vsel %vm493, %v486, %v490
        %v495 = vand.u32 2147483647, %v465
        %vm496 = vcmp.eq.f32.partialorder %v495, 8.507059e+37
        %v497 = vand.u32 %v465, 2147483648
        %v498 = vor.u32 1.1754944e-38, %v497
        %v499 = vsel %vm496, %v498, %v494
        %v500 = vmul.f32 %v470, %v485
        %v501 = vmul.f32 %v471, %v499
        %v502 = vld [vmem:[%s259] sm:$0xff]
        %v503 = vlaneseq
        %v504 = vand.u32 %v503, 127
        %v505 = vadd.s32 %v504, 128
        %506 = vset.pattern.permute.xlu0 0
        %507 = vperm.xlu0 %506, %v502
        %v508 = vpop.permute.xlu0 %507
        %vm509 = vcmp.eq.s32.totalorder %v504, %v508
        %vm510 = vcmp.eq.s32.totalorder %v505, %v508
        %v511 = vsel %vm509, 1, 0
        %v512 = vsel %vm510, 1, 0
        %v513 = vcvt.s32.f32 %v511
        %v514 = vcvt.s32.f32 %v512
        %v515 = vmul.f32 %v513, 0.1
        %v516 = vmul.f32 %v514, 0.1
        %v517 = vsub.f32 %v500, %v515
        %v518 = vsub.f32 %v501, %v516
        %v519 = vld [vmem:[%s3] sm:$0x3]
        %v521 = vperm.slane %v519, 0
        %v522 = vperm.slane %v519, 1
        %v525 = vadd.f32 %v517, %v521
        %v526 = vadd.f32 %v518, %v522
        %v527 = vmax.f32 %v525, %v526
        %528 = vmax.xlane.f32.xlu0 %v527
        %v529 = vpop.xlane.xlu0 %528
        %v530 = vsub.f32 %v525, %v529
        %v531 = vsub.f32 %v526, %v529
        %v532 = vmul.f32 %v530, 1.442695
        %v533 = vpow.pop %v532
        %v534 = vmul.f32 %v531, 1.442695
        %v535 = vpow.pop %v534
        %v536 = vadd.f32 %v533, %v535
        %537 = vadd.xlane.f32.xlu0 %v536
        %v538 = vpop.xlane.xlu0 %537
        %v539 = vlog2.pop %v538
        %v540 = vmul.f32 %v539, 0.6931472
        %v541 = vadd.f32 %v540, %v529
        %v542 = vmul.f32 %v525, %v513
        %v543 = vmul.f32 %v526, %v514
        %v544 = vadd.f32 %v542, %v543
        %545 = vadd.xlane.f32.xlu0 %v544
        %v546 = vpop.xlane.xlu0 %545
        %s547 = smul.u32 %s20, 4
        %s548 = sadd.s32 %s547, %s21
        %s549 = smul.u32 %s548, 8
        %v550 = vlaneseq
        %v551 = vshrl.u32 %v550, 7
        %v552 = vstv %s549
        %v553 = vadd.s32 %v552, %v551
        %vm554 = vcmp.lt.s32.totalorder %v553, 64
        %v555 = vsel %vm554, 1, 0
        %v556 = vcvt.s32.f32 %v555
        %v557 = vld [vmem:[%s264] sm:$0x1]
        %v558 = vsub.f32 %v541, %v546
        %v559 = vmul.f32 %v558, %v556
        %vm560 = vcmask 7168
        %v561 = vsel %vm560, %v559, 0.0
        %562 = vadd.xlane.f32.xlu0 %v561
        %v563 = vpop.xlane.xlu0 %562
        %v564 = vrot.slane %v563, 4
        %v565 = vadd.f32 %v563, %v564
        %v566 = vrot.slane %v565, 2
        %v567 = vadd.f32 %v565, %v566
        %v568 = vrot.slane %v567, 1
        %v569 = vadd.f32 %v567, %v568
        %s570 = vtos %v569
        %v571 = vstv %s570
        %v572 = vadd.f32 %v557, %v571
        %vm573 = vcmask 0
        %574 = vst.msk [vmem:[%s264] sm:$0x1] %vm573, %v572
        %p575 = scmp.lt.s32.totalorder %s20, 1
        %s576 = scalar_select %p575, %s20, 1
        %s577 = scalar_lea.vmem %s4, %s576
        // Predicated region
        $region45: #{tpu_custom_call.1} parent=35 // pred_check
          %p578 = pneg %p148
        $region46: #{tpu_custom_call.1} parent=35 // pred_check_branch
          %580 = sbr.rel (%p578) target = $region48
        $region47: #{tpu_custom_call.1} parent=35 // pred_region
          _
        $region48: #{tpu_custom_call.1} parent=35 // pred_fallthru
          _
      $region36: #{tpu_custom_call.1} parent=5 // pred_fallthru
        _
      %p581 = scmp.le.s32.totalorder 2, %s11
      // Predicated region
      $region49: #{tpu_custom_call.1} parent=5 // pred_check
        %p582 = pneg %p581
      $region50: #{tpu_custom_call.1} parent=5 // pred_check_branch
        %584 = sbr.rel (%p582) target = $region52
      $region51: #{tpu_custom_call.1} parent=5 // pred_region
        %s585 = ssub.s32 %s11, 2
        // Predicated region
        $region53: #{tpu_custom_call.1} parent=51 // pred_check
          %p586 = pneg %p154
        $region54: #{tpu_custom_call.1} parent=51 // pred_check_branch
          %588 = sbr.rel (%p586) target = $region56
        $region55: #{tpu_custom_call.1} parent=51 // pred_region
          %p589 = scmp.lt.s32.totalorder %s22, 1
          %s590 = scalar_select %p589, %s22, 1
          %s591 = scalar_lea.vmem %s4, %s590
        $region56: #{tpu_custom_call.1} parent=51 // pred_fallthru
          _
      $region52: #{tpu_custom_call.1} parent=5 // pred_fallthru
        _
    $region6: #{tpu_custom_call.1} parent=1 // loop_footer
      %s15 = sadd.s32 1, %s11
    $region7: #{tpu_custom_call.1} parent=1 // loop_footer_branch
      %10 = sbr.rel target = $region3
    $region8: #{tpu_custom_call.1} parent=1 // loop_exit
      _
    %592 = vsyncpa [#allocation3], 1
    %s593 = scalar_lea.sflag [#allocation3], 1
    %594 = vsyncpa %s593, 1

</llo_original>
